<compile_context>
chip_gen: v6e
topology: v6e:2x2x1
jax: 0.10.0
libtpu: 0.0.40
codegen_flags: <defaults>
</compile_context>

<pallas_src>
import functools

import jax
import jax.numpy as jnp
from jax.experimental import pallas as pl
from jax.experimental.pallas import tpu as pltpu


VMEM_LIMIT_BYTES = 48 * 1024 * 1024   # explicit scoped-VMEM budget (< v7x 64 MiB physical)


# ----------------------------------------------------------------------------
# helpers
# ----------------------------------------------------------------------------

def _pick_tile(dim, target, align):
    """Largest multiple of `align` that divides `dim` and is <= target; else full dim."""
    if dim <= target:
        return dim
    t = (target // align) * align
    while t >= align:
        if dim % t == 0:
            return t
        t -= align
    return dim


def _probe_kernel(x_ref, o_ref):
    o_ref[...] = x_ref[...] * 2.0


@functools.lru_cache(maxsize=None)
def _single_buffer_ok():
    """True iff pipeline_mode=pl.Buffered(1) is supported (probed eagerly once)."""
    if not hasattr(pl, "Buffered"):
        return False
    try:
        out = pl.pallas_call(
            _probe_kernel,
            out_shape=jax.ShapeDtypeStruct((8, 128), jnp.float32),
            grid=(2,),
            in_specs=[pl.BlockSpec((8, 128), lambda i: (0, 0),
                                   pipeline_mode=pl.Buffered(1))],
            out_specs=pl.BlockSpec((8, 128), lambda i: (0, 0)),
        )(jnp.ones((8, 128), jnp.float32))
        jax.block_until_ready(out)
        return True
    except Exception:
        return False


def _inv_spec(block_shape, index_map):
    """BlockSpec for a grid-invariant operand: single-buffered when supported."""
    if _single_buffer_ok():
        return pl.BlockSpec(block_shape, index_map, pipeline_mode=pl.Buffered(1))
    return pl.BlockSpec(block_shape, index_map)


# ----------------------------------------------------------------------------
# kernel 1: LayerNorm + per-head QKV projection  ->  qkv [B, H, T, 3*hd] bf16
# ----------------------------------------------------------------------------

def _ln_qkv_kernel(x_ref, g_ref, b_ref, w_ref, wb_ref, o_ref):
    x = x_ref[0].astype(jnp.float32)                            # (tq, E)
    mu = jnp.mean(x, axis=-1, keepdims=True)
    var = jnp.mean(jnp.square(x - mu), axis=-1, keepdims=True)
    xn = (x - mu) * jax.lax.rsqrt(var + 1e-5) * g_ref[...] + b_ref[...]
    y = jnp.dot(xn.astype(jnp.bfloat16), w_ref[0],              # w already bf16 (E, 3hd)
                preferred_element_type=jnp.float32) + wb_ref[0]
    o_ref[0, 0] = y.astype(o_ref.dtype)


def ln_qkv_heads(h, g, b, w_h, b_h):
    B, T, E = h.shape
    H, _, thd = w_h.shape
    tq = _pick_tile(T, 512, 8)
    return pl.pallas_call(
        _ln_qkv_kernel,
        out_shape=jax.ShapeDtypeStruct((B, H, T, thd), jnp.bfloat16),
        grid=(B, T // tq, H),
        in_specs=[pl.BlockSpec((1, tq, E), lambda bb, tt, hh: (bb, tt, 0)),
                  _inv_spec((1, E), lambda bb, tt, hh: (0, 0)),
                  _inv_spec((1, E), lambda bb, tt, hh: (0, 0)),
                  pl.BlockSpec((1, E, thd), lambda bb, tt, hh: (hh, 0, 0)),
                  pl.BlockSpec((1, 1, thd), lambda bb, tt, hh: (hh, 0, 0))],
        out_specs=pl.BlockSpec((1, 1, tq, thd), lambda bb, tt, hh: (bb, hh, tt, 0)),
        compiler_params=pltpu.CompilerParams(
            dimension_semantics=("parallel", "parallel", "parallel"),
            vmem_limit_bytes=VMEM_LIMIT_BYTES),
    )(h, g.reshape(1, E), b.reshape(1, E), w_h, b_h)


# ----------------------------------------------------------------------------
# kernel 2: per-head attention + out_proj + residual, accumulated over heads
#   out[b] = res[b] + bo + sum_h softmax(q_h k_h^T * scale + mask) v_h @ Wo[h]
# ----------------------------------------------------------------------------

def _attn_kernel(res_ref, qkv_ref, vis_ref, wo_ref, bo_ref, o_ref, *, head_dim):
    hh = pl.program_id(1)

    @pl.when(hh == 0)
    def _():
        o_ref[0] = res_ref[0] + bo_ref[...]                     # residual + out_proj bias

    qkv = qkv_ref[0, 0]                                         # (T, 3*hd) bf16
    q = qkv[:, :head_dim]
    k = qkv[:, head_dim:2 * head_dim]
    v = qkv[:, 2 * head_dim:]
    # TODO(synk): flash-style KV tiling for long T (full [T,T] scores held here).
    s = jax.lax.dot_general(q, k, (((1,), (1,)), ((), ())),
                            preferred_element_type=jnp.float32)
    s = s * (1.0 / (head_dim ** 0.5)) + vis_ref[0]              # additive key log-mask
    smax = jnp.max(s, axis=-1, keepdims=True)
    p = jnp.exp(s - smax)
    denom = jnp.sum(p, axis=-1, keepdims=True)
    p = p * pl.reciprocal(denom, approx=True)
    attn = jnp.dot(p.astype(jnp.bfloat16), v, preferred_element_type=jnp.float32)
    proj = jnp.dot(attn.astype(jnp.bfloat16), wo_ref[0],
                   preferred_element_type=jnp.float32)          # (T, E)
    o_ref[0] = o_ref[0] + proj


def attn_residual_block(res, qkv, vis_log, wo_h, bo):
    B, T, E = res.shape
    H, hd, _ = wo_h.shape
    return pl.pallas_call(
        functools.partial(_attn_kernel, head_dim=hd),
        out_shape=jax.ShapeDtypeStruct((B, T, E), jnp.float32),
        grid=(B, H),
        in_specs=[pl.BlockSpec((1, T, E), lambda bb, hh: (bb, 0, 0)),
                  pl.BlockSpec((1, 1, T, 3 * hd), lambda bb, hh: (bb, hh, 0, 0)),
                  pl.BlockSpec((1, 1, T), lambda bb, hh: (bb, 0, 0)),
                  pl.BlockSpec((1, hd, E), lambda bb, hh: (hh, 0, 0)),
                  _inv_spec((1, E), lambda bb, hh: (0, 0))],
        out_specs=pl.BlockSpec((1, T, E), lambda bb, hh: (bb, 0, 0)),
        compiler_params=pltpu.CompilerParams(
            dimension_semantics=("parallel", "arbitrary"),
            vmem_limit_bytes=VMEM_LIMIT_BYTES),
    )(res, qkv, vis_log, wo_h, bo)


# ----------------------------------------------------------------------------
# kernel 3: fused FFN block  y = h + FF2(LeakyReLU(FF1(LayerNorm(h))))
# ----------------------------------------------------------------------------

def _ffn_kernel(h_ref, g_ref, b_ref, w1_ref, b1_ref, w2_ref, b2_ref, o_ref):
    h = h_ref[...].astype(jnp.float32)
    mu = jnp.mean(h, axis=-1, keepdims=True)
    var = jnp.mean(jnp.square(h - mu), axis=-1, keepdims=True)
    xn = (h - mu) * jax.lax.rsqrt(var + 1e-5) * g_ref[...] + b_ref[...]
    y = jnp.dot(xn.astype(jnp.bfloat16), w1_ref[...],
                preferred_element_type=jnp.float32) + b1_ref[...]
    y = jnp.where(y > 0, y, 0.01 * y)                           # torch LeakyReLU default
    y = jnp.dot(y.astype(jnp.bfloat16), w2_ref[...],
                preferred_element_type=jnp.float32) + b2_ref[...]
    o_ref[...] = (h + y).astype(o_ref.dtype)


def ffn_block(h, g, b, w1, b1, w2, b2):
    M, E = h.shape
    F = w1.shape[1]
    tm = _pick_tile(M, 512, 8)
    return pl.pallas_call(
        _ffn_kernel,
        out_shape=jax.ShapeDtypeStruct((M, E), jnp.float32),
        grid=(M // tm,),
        in_specs=[pl.BlockSpec((tm, E), lambda i: (i, 0)),
                  _inv_spec((1, E), lambda i: (0, 0)),
                  _inv_spec((1, E), lambda i: (0, 0)),
                  _inv_spec((E, F), lambda i: (0, 0)),
                  _inv_spec((1, F), lambda i: (0, 0)),
                  _inv_spec((F, E), lambda i: (0, 0)),
                  _inv_spec((1, E), lambda i: (0, 0))],
        out_specs=pl.BlockSpec((tm, E), lambda i: (i, 0)),
        compiler_params=pltpu.CompilerParams(
            dimension_semantics=("parallel",),
            vmem_limit_bytes=VMEM_LIMIT_BYTES),
    )(h, g.reshape(1, E), b.reshape(1, E), w1, b1.reshape(1, F), w2, b2.reshape(1, E))


# ----------------------------------------------------------------------------
# kernel 4: fused final LayerNorm + tied-weight vocab projection + cross-entropy
#   online logsumexp tiled over (rows, vocab); also emits raw = LN(h)
# ----------------------------------------------------------------------------

def _ln_vocab_ce_kernel(h_ref, g_ref, b_ref, w_ref, bias_ref, lab_ref,
                        loss_ref, raw_ref, xn_bf, m_run, l_run, t_run, *, tv, pad):
    j = pl.program_id(1)

    @pl.when(j == 0)
    def _():
        x = h_ref[...].astype(jnp.float32)
        mu = jnp.mean(x, axis=-1, keepdims=True)
        var = jnp.mean(jnp.square(x - mu), axis=-1, keepdims=True)
        xn = (x - mu) * jax.lax.rsqrt(var + 1e-5) * g_ref[...] + b_ref[...]
        raw_ref[...] = xn.astype(raw_ref.dtype)
        xn_bf[...] = xn.astype(jnp.bfloat16)
        m_run[...] = jnp.full_like(m_run, -jnp.inf)
        l_run[...] = jnp.zeros_like(l_run)
        t_run[...] = jnp.zeros_like(t_run)

    # logits tile = LN(h) @ emb_w[tile]^T + bias[tile]   (emb_w in native [V, E], bf16)
    logits = jax.lax.dot_general(xn_bf[...], w_ref[...], (((1,), (1,)), ((), ())),
                                 preferred_element_type=jnp.float32) + bias_ref[...]

    labels = lab_ref[...]                                       # (tm, 1) int32
    vidx = j * tv + jax.lax.broadcasted_iota(jnp.int32, logits.shape, 1)
    t_run[...] += jnp.sum(jnp.where(vidx == labels, logits, 0.0),
                          axis=-1, keepdims=True)

    m_new = jnp.maximum(m_run[...], jnp.max(logits, axis=-1, keepdims=True))
    l_run[...] = (l_run[...] * jnp.exp(m_run[...] - m_new)
                  + jnp.sum(jnp.exp(logits - m_new), axis=-1, keepdims=True))
    m_run[...] = m_new

    @pl.when(j == pl.num_programs(1) - 1)
    def _():
        lse = m_run[...] + jnp.log(l_run[...])
        valid = labels != pad
        loss_ref[...] = jnp.where(valid, lse - t_run[...], 0.0).astype(loss_ref.dtype)


def ln_vocab_ce(h, g, b, emb_bf16, out_bias, labels, *, pad):
    M, E = h.shape
    V = emb_bf16.shape[0]
    tm = _pick_tile(M, 512, 8)
    tv = _pick_tile(V, 1024, 128)
    return pl.pallas_call(
        functools.partial(_ln_vocab_ce_kernel, tv=tv, pad=pad),
        out_shape=(jax.ShapeDtypeStruct((M, 1), jnp.float32),
                   jax.ShapeDtypeStruct((M, E), jnp.float32)),
        grid=(M // tm, V // tv),
        in_specs=[pl.BlockSpec((tm, E), lambda i, j: (i, 0)),
                  _inv_spec((1, E), lambda i, j: (0, 0)),
                  _inv_spec((1, E), lambda i, j: (0, 0)),
                  pl.BlockSpec((tv, E), lambda i, j: (j, 0)),
                  pl.BlockSpec((1, tv), lambda i, j: (0, j)),
                  pl.BlockSpec((tm, 1), lambda i, j: (i, 0))],
        out_specs=(pl.BlockSpec((tm, 1), lambda i, j: (i, 0)),
                   pl.BlockSpec((tm, E), lambda i, j: (i, 0))),
        scratch_shapes=[pltpu.VMEM((tm, E), jnp.bfloat16),
                        pltpu.VMEM((tm, 1), jnp.float32),
                        pltpu.VMEM((tm, 1), jnp.float32),
                        pltpu.VMEM((tm, 1), jnp.float32)],
        compiler_params=pltpu.CompilerParams(
            dimension_semantics=("parallel", "arbitrary"),
            vmem_limit_bytes=VMEM_LIMIT_BYTES),
    )(h, g.reshape(1, E), b.reshape(1, E), emb_bf16, out_bias.reshape(1, V), labels)


# ----------------------------------------------------------------------------
# Model (glue in plain JAX, compute in the kernels above)
# ----------------------------------------------------------------------------

def transformer_forward(params, x, y, pos, *, nhead, pad):
    del pos  # pos_emb=False in the reference constructor defaults
    B, T = x.shape
    E = params["norm_g"].shape[0]
    assert E % nhead == 0
    M = B * T

    h = params["emb_w"][x].astype(jnp.float32)                  # [B, T, E] embedding gather

    # key-padding visibility as [B, 1, T] additive log-mask (finite -1e9, no [B,T,T] tensor)
    vis_log = jnp.where(x != pad, 0.0, -1e9).astype(jnp.float32).reshape(B, 1, T)

    for lp in params["layers"]:
        qkv = ln_qkv_heads(h, lp["attn_ln_g"], lp["attn_ln_b"],
                           lp["qkv_w"], lp["qkv_b"])            # [B, H, T, 3hd] bf16
        h = attn_residual_block(h, qkv, vis_log,
                                lp["out_proj_w"], lp["out_proj_b"])  # h + out_proj(attn)
        h = ffn_block(h.reshape(M, E), lp["ff_ln_g"], lp["ff_ln_b"],
                      lp["ff1_w"], lp["ff1_b"],
                      lp["ff2_w"], lp["ff2_b"]).reshape(B, T, E)

    y_flat = y.reshape(M, 1).astype(jnp.int32)
    per_row, raw = ln_vocab_ce(h.reshape(M, E), params["norm_g"], params["norm_b"],
                               params["emb_w_bf16"], params["out_bias"], y_flat, pad=pad)
    n_valid = jnp.sum((y.reshape(-1) != pad).astype(jnp.float32))
    loss = jnp.sum(per_row) / jnp.maximum(n_valid, 1.0)

    state = {
        "raw_output": raw.reshape(B, T, E),
        "head": jnp.zeros((B, T, T), jnp.float32),
        "loghead": jnp.zeros((B * T, T), jnp.float32),
        "att_mask": jnp.zeros((B, T, T), jnp.float32),
    }
    return loss, state


def init_params(key, ntokens, emb_size, nlayers):
    """Reference-style (f32, torch-layout) parameters."""
    ks = jax.random.split(key, 1 + nlayers)
    emb_w = jax.random.uniform(ks[0], (ntokens, emb_size), jnp.float32, -0.1, 0.1)
    kb = 1.0 / (emb_size ** 0.5)
    fb = 1.0 / ((4 * emb_size) ** 0.5)
    layers_p = []
    for li in range(nlayers):
        lk = jax.random.split(ks[1 + li], 6)
        layers_p.append({
            "attn_ln_g": jnp.ones((emb_size,), jnp.float32),
            "attn_ln_b": jnp.zeros((emb_size,), jnp.float32),
            "in_proj_w": jax.random.uniform(lk[0], (emb_size, 3 * emb_size), jnp.float32, -kb, kb),
            "in_proj_b": jnp.zeros((3 * emb_size,), jnp.float32),
            "out_proj_w": jax.random.uniform(lk[1], (emb_size, emb_size), jnp.float32, -kb, kb),
            "out_proj_b": jnp.zeros((emb_size,), jnp.float32),
            "ff_ln_g": jnp.ones((emb_size,), jnp.float32),
            "ff_ln_b": jnp.zeros((emb_size,), jnp.float32),
            "ff1_w": jax.random.uniform(lk[2], (emb_size, 4 * emb_size), jnp.float32, -kb, kb),
            "ff1_b": jax.random.uniform(lk[3], (4 * emb_size,), jnp.float32, -kb, kb),
            "ff2_w": jax.random.uniform(lk[4], (4 * emb_size, emb_size), jnp.float32, -fb, fb),
            "ff2_b": jax.random.uniform(lk[5], (emb_size,), jnp.float32, -fb, fb),
        })
    return {
        "emb_w": emb_w,
        "layers": layers_p,
        "norm_g": jnp.ones((emb_size,), jnp.float32),
        "norm_b": jnp.zeros((emb_size,), jnp.float32),
        "out_bias": jnp.zeros((ntokens,), jnp.float32),   # tied output weight, zero bias
    }


def prepare_params(params, nhead):
    """One-time kernel-ready re-layout: bf16 weights, head-major QKV/out_proj weights."""
    E = params["norm_g"].shape[0]
    assert E % nhead == 0
    hd = E // nhead
    layers = []
    for lp in params["layers"]:
        # [E, 3E] -> [H, E, 3*hd] so head h's (q|k|v) columns are one contiguous slab
        wq = lp["in_proj_w"].reshape(E, 3, nhead, hd).transpose(2, 0, 1, 3)
        wq = wq.reshape(nhead, E, 3 * hd).astype(jnp.bfloat16)
        bq = lp["in_proj_b"].reshape(3, nhead, hd).transpose(1, 0, 2)
        bq = bq.reshape(nhead, 1, 3 * hd).astype(jnp.float32)
        layers.append({
            "attn_ln_g": lp["attn_ln_g"],
            "attn_ln_b": lp["attn_ln_b"],
            "qkv_w": wq,
            "qkv_b": bq,
            "out_proj_w": lp["out_proj_w"].reshape(nhead, hd, E).astype(jnp.bfloat16),
            "out_proj_b": lp["out_proj_b"].reshape(1, E).astype(jnp.float32),
            "ff_ln_g": lp["ff_ln_g"],
            "ff_ln_b": lp["ff_ln_b"],
            "ff1_w": lp["ff1_w"].astype(jnp.bfloat16),
            "ff1_b": lp["ff1_b"],
            "ff2_w": lp["ff2_w"].astype(jnp.bfloat16),
            "ff2_b": lp["ff2_b"],
        })
    return {
        "emb_w": params["emb_w"],                              # f32 for the gather
        "emb_w_bf16": params["emb_w"].astype(jnp.bfloat16),    # bf16 for the CE contraction
        "layers": layers,
        "norm_g": params["norm_g"],
        "norm_b": params["norm_b"],
        "out_bias": params["out_bias"],
    }


if __name__ == "__main__":
    B, T, E, H, L, V, PAD = 2, 16, 32, 8, 2, 64, 0

    key = jax.random.PRNGKey(0)
    pk, xk, yk = jax.random.split(key, 3)
    params = prepare_params(init_params(pk, V, E, L), nhead=H)

    x = jax.random.randint(xk, (B, T), 1, V, dtype=jnp.int32)
    x = x.at[0, -3:].set(PAD)                    # a few pad tokens to exercise masking
    y = jax.random.randint(yk, (B, T), 1, V, dtype=jnp.int32)
    y = y.at[1, -2:].set(PAD)
    pos = jnp.broadcast_to(jnp.arange(T, dtype=jnp.int32)[None, :], (B, T))

    _single_buffer_ok()                          # warm the Buffered(1) probe eagerly

    fwd = jax.jit(functools.partial(transformer_forward, nhead=H, pad=PAD))
    loss, state = fwd(params, x, y, pos)
    jax.block_until_ready((loss, state))
    assert jnp.isfinite(loss)
    assert state["raw_output"].shape == (B, T, E)
    print("KERNEL_OK")
</pallas_src>

<mosaic_0001>
module attributes {stable_mosaic.version = 11 : i64} {
  func.func @_probe_kernel(%arg0: i32, %arg1: memref<8x128xf32, #tpu.memory_space<vmem>>, %arg2: memref<8x128xf32, #tpu.memory_space<vmem>>) attributes {dimension_semantics = [#tpu.dimension_semantics<arbitrary>], iteration_bounds = array<i64: 2>, scalar_prefetch = 0 : i64, scratch_operands = 0 : i64, tpu.core_type = #tpu.core_type<tc>, window_params = [{pipeline_mode = #tpu.pipeline_mode<synchronous>, transform_indices = @transform_0, window_bounds = array<i64: 8, 128>}, {pipeline_mode = #tpu.pipeline_mode<synchronous>, transform_indices = @transform_1, window_bounds = array<i64: 8, 128>}]} {
    %c0 = arith.constant 0 : index
    %c0_0 = arith.constant 0 : index
    %0 = vector.load %arg1[%c0, %c0_0] : memref<8x128xf32, #tpu.memory_space<vmem>>, vector<8x128xf32>
    %cst = arith.constant 2.000000e+00 : f32
    %1 = vector.broadcast %cst : f32 to vector<8x128xf32>
    %2 = arith.mulf %0, %1 : vector<8x128xf32>
    %c0_1 = arith.constant 0 : index
    %c0_2 = arith.constant 0 : index
    %3 = vector.load %arg2[%c0_1, %c0_2] : memref<8x128xf32, #tpu.memory_space<vmem>>, vector<8x128xf32>
    tpu.vector_store %arg2[%c0_1, %c0_2], %2 {strides = array<i32>} : memref<8x128xf32, #tpu.memory_space<vmem>>, vector<8x128xf32>,
    return
  }
  func.func @transform_0(%arg0: i32) -> (i32, i32) {
    %c0_i32 = arith.constant 0 : i32
    %c0_i32_0 = arith.constant 0 : i32
    %c0_i32_1 = arith.constant 0 : i32
    return %c0_i32, %c0_i32_0 : i32, i32
  }
  func.func @transform_1(%arg0: i32) -> (i32, i32) {
    %c0_i32 = arith.constant 0 : i32
    %c0_i32_0 = arith.constant 0 : i32
    %c0_i32_1 = arith.constant 0 : i32
    return %c0_i32, %c0_i32_0 : i32, i32
  }
}

module attributes {stable_mosaic.version = 11 : i64} {
  func.func @_ln_qkv_kernel(%arg0: i32, %arg1: i32, %arg2: i32, %arg3: memref<1x16x32xf32, #tpu.memory_space<vmem>>, %arg4: memref<1x32xf32, #tpu.memory_space<vmem>>, %arg5: memref<1x32xf32, #tpu.memory_space<vmem>>, %arg6: memref<1x32x12xbf16, #tpu.memory_space<vmem>>, %arg7: memref<1x1x12xf32, #tpu.memory_space<vmem>>, %arg8: memref<1x1x16x12xbf16, #tpu.memory_space<vmem>>) attributes {dimension_semantics = [#tpu.dimension_semantics<parallel>, #tpu.dimension_semantics<parallel>, #tpu.dimension_semantics<parallel>], iteration_bounds = array<i64: 2, 1, 8>, scalar_prefetch = 0 : i64, scratch_operands = 0 : i64, tpu.core_type = #tpu.core_type<tc>, window_params = [{transform_indices = @transform_0, window_bounds = array<i64: 1, 16, 32>}, {pipeline_mode = #tpu.pipeline_mode<synchronous>, transform_indices = @transform_1, window_bounds = array<i64: 1, 32>}, {pipeline_mode = #tpu.pipeline_mode<synchronous>, transform_indices = @transform_2, window_bounds = array<i64: 1, 32>}, {transform_indices = @transform_3, window_bounds = array<i64: 1, 32, 12>}, {transform_indices = @transform_4, window_bounds = array<i64: 1, 1, 12>}, {transform_indices = @transform_5, window_bounds = array<i64: 1, 1, 16, 12>}]} {
    %c0 = arith.constant 0 : index
    %c0_0 = arith.constant 0 : index
    %c0_1 = arith.constant 0 : index
    %0 = vector.load %arg3[%c0, %c0_0, %c0_1] : memref<1x16x32xf32, #tpu.memory_space<vmem>>, vector<1x16x32xf32>
    %1 = vector.shape_cast %0 : vector<1x16x32xf32> to vector<16x32xf32>
    %cst = arith.constant dense<0.000000e+00> : vector<16xf32>
    %2 = vector.multi_reduction <add>, %1, %cst [1] : vector<16x32xf32> to vector<16xf32>
    %3 = vector.shape_cast %2 : vector<16xf32> to vector<16x1xf32>
    %cst_2 = arith.constant 3.200000e+01 : f32
    %4 = vector.broadcast %cst_2 : f32 to vector<16x1xf32>
    %5 = arith.divf %3, %4 : vector<16x1xf32>
    %6 = vector.broadcast %5 : vector<16x1xf32> to vector<16x32xf32>
    %7 = arith.subf %1, %6 : vector<16x32xf32>
    %8 = arith.mulf %7, %7 : vector<16x32xf32>
    %cst_3 = arith.constant dense<0.000000e+00> : vector<16xf32>
    %9 = vector.multi_reduction <add>, %8, %cst_3 [1] : vector<16x32xf32> to vector<16xf32>
    %10 = vector.shape_cast %9 : vector<16xf32> to vector<16x1xf32>
    %cst_4 = arith.constant 3.200000e+01 : f32
    %11 = vector.broadcast %cst_4 : f32 to vector<16x1xf32>
    %12 = arith.divf %10, %11 : vector<16x1xf32>
    %13 = vector.broadcast %5 : vector<16x1xf32> to vector<16x32xf32>
    %14 = arith.subf %1, %13 : vector<16x32xf32>
    %cst_5 = arith.constant 9.99999974E-6 : f32
    %15 = vector.broadcast %cst_5 : f32 to vector<16x1xf32>
    %16 = arith.addf %12, %15 : vector<16x1xf32>
    %17 = math.rsqrt %16 : vector<16x1xf32>
    %18 = vector.broadcast %17 : vector<16x1xf32> to vector<16x32xf32>
    %19 = arith.mulf %14, %18 : vector<16x32xf32>
    %c0_6 = arith.constant 0 : index
    %c0_7 = arith.constant 0 : index
    %20 = vector.load %arg4[%c0_6, %c0_7] : memref<1x32xf32, #tpu.memory_space<vmem>>, vector<1x32xf32>
    %21 = vector.broadcast %20 : vector<1x32xf32> to vector<16x32xf32>
    %22 = arith.mulf %19, %21 : vector<16x32xf32>
    %c0_8 = arith.constant 0 : index
    %c0_9 = arith.constant 0 : index
    %23 = vector.load %arg5[%c0_8, %c0_9] : memref<1x32xf32, #tpu.memory_space<vmem>>, vector<1x32xf32>
    %24 = vector.broadcast %23 : vector<1x32xf32> to vector<16x32xf32>
    %25 = arith.addf %22, %24 : vector<16x32xf32>
    %26 = arith.truncf %25 : vector<16x32xf32> to vector<16x32xbf16>
    %c0_10 = arith.constant 0 : index
    %c0_11 = arith.constant 0 : index
    %c0_12 = arith.constant 0 : index
    %27 = vector.load %arg6[%c0_10, %c0_11, %c0_12] : memref<1x32x12xbf16, #tpu.memory_space<vmem>>, vector<1x32x12xbf16>
    %28 = vector.shape_cast %27 : vector<1x32x12xbf16> to vector<32x12xbf16>
    %cst_13 = arith.constant dense<0.000000e+00> : vector<16x12xf32>
    %29 = tpu.matmul %26, %28, %cst_13 {dimension_numbers = #tpu.dot_dimension_numbers<[1], [0], [0], [1], [0, 0, 1, 1], [], []>} : vector<16x32xbf16>, vector<32x12xbf16>, vector<16x12xf32> -> vector<16x12xf32>
    %c0_14 = arith.constant 0 : index
    %c0_15 = arith.constant 0 : index
    %c0_16 = arith.constant 0 : index
    %30 = vector.load %arg7[%c0_14, %c0_15, %c0_16] : memref<1x1x12xf32, #tpu.memory_space<vmem>>, vector<1x1x12xf32>
    %31 = vector.shape_cast %30 : vector<1x1x12xf32> to vector<1x12xf32>
    %32 = vector.broadcast %31 : vector<1x12xf32> to vector<16x12xf32>
    %33 = arith.addf %29, %32 : vector<16x12xf32>
    %34 = arith.truncf %33 : vector<16x12xf32> to vector<16x12xbf16>
    %c0_17 = arith.constant 0 : index
    %c0_18 = arith.constant 0 : index
    %c0_19 = arith.constant 0 : index
    %c0_20 = arith.constant 0 : index
    %35 = vector.load %arg8[%c0_17, %c0_18, %c0_19, %c0_20] : memref<1x1x16x12xbf16, #tpu.memory_space<vmem>>, vector<1x1x16x12xbf16>
    %36 = vector.shape_cast %35 : vector<1x1x16x12xbf16> to vector<16x12xbf16>
    %37 = vector.shape_cast %34 : vector<16x12xbf16> to vector<1x1x16x12xbf16>
    tpu.vector_store %arg8[%c0_17, %c0_18, %c0_19, %c0_20], %37 {strides = array<i32>} : memref<1x1x16x12xbf16, #tpu.memory_space<vmem>>, vector<1x1x16x12xbf16>,
    return
  }
  func.func @transform_0(%arg0: i32, %arg1: i32, %arg2: i32) -> (i32, i32, i32) {
    %c0_i32 = arith.constant 0 : i32
    %c0_i32_0 = arith.constant 0 : i32
    return %arg0, %arg1, %c0_i32 : i32, i32, i32
  }
  func.func @transform_1(%arg0: i32, %arg1: i32, %arg2: i32) -> (i32, i32) {
    %c0_i32 = arith.constant 0 : i32
    %c0_i32_0 = arith.constant 0 : i32
    %c0_i32_1 = arith.constant 0 : i32
    return %c0_i32, %c0_i32_0 : i32, i32
  }
  func.func @transform_2(%arg0: i32, %arg1: i32, %arg2: i32) -> (i32, i32) {
    %c0_i32 = arith.constant 0 : i32
    %c0_i32_0 = arith.constant 0 : i32
    %c0_i32_1 = arith.constant 0 : i32
    return %c0_i32, %c0_i32_0 : i32, i32
  }
  func.func @transform_3(%arg0: i32, %arg1: i32, %arg2: i32) -> (i32, i32, i32) {
    %c0_i32 = arith.constant 0 : i32
    %c0_i32_0 = arith.constant 0 : i32
    %c0_i32_1 = arith.constant 0 : i32
    return %arg2, %c0_i32, %c0_i32_0 : i32, i32, i32
  }
  func.func @transform_4(%arg0: i32, %arg1: i32, %arg2: i32) -> (i32, i32, i32) {
    %c0_i32 = arith.constant 0 : i32
    %c0_i32_0 = arith.constant 0 : i32
    %c0_i32_1 = arith.constant 0 : i32
    return %arg2, %c0_i32, %c0_i32_0 : i32, i32, i32
  }
  func.func @transform_5(%arg0: i32, %arg1: i32, %arg2: i32) -> (i32, i32, i32, i32) {
    %c0_i32 = arith.constant 0 : i32
    %c0_i32_0 = arith.constant 0 : i32
    return %arg0, %arg2, %arg1, %c0_i32 : i32, i32, i32, i32
  }
}

module attributes {stable_mosaic.version = 11 : i64} {
  func.func @_attn_kernel(%arg0: i32, %arg1: i32, %arg2: memref<1x16x32xf32, #tpu.memory_space<vmem>>, %arg3: memref<1x1x16x12xbf16, #tpu.memory_space<vmem>>, %arg4: memref<1x1x16xf32, #tpu.memory_space<vmem>>, %arg5: memref<1x4x32xbf16, #tpu.memory_space<vmem>>, %arg6: memref<1x32xf32, #tpu.memory_space<vmem>>, %arg7: memref<1x16x32xf32, #tpu.memory_space<vmem>>) attributes {dimension_semantics = [#tpu.dimension_semantics<parallel>, #tpu.dimension_semantics<arbitrary>], iteration_bounds = array<i64: 2, 8>, scalar_prefetch = 0 : i64, scratch_operands = 0 : i64, tpu.core_type = #tpu.core_type<tc>, window_params = [{transform_indices = @transform_0, window_bounds = array<i64: 1, 16, 32>}, {transform_indices = @transform_1, window_bounds = array<i64: 1, 1, 16, 12>}, {transform_indices = @transform_2, window_bounds = array<i64: 1, 1, 16>}, {transform_indices = @transform_3, window_bounds = array<i64: 1, 4, 32>}, {pipeline_mode = #tpu.pipeline_mode<synchronous>, transform_indices = @transform_4, window_bounds = array<i64: 1, 32>}, {transform_indices = @transform_5, window_bounds = array<i64: 1, 16, 32>}]} {
    %c0_i32 = arith.constant 0 : i32
    %0 = arith.cmpi eq, %arg1, %c0_i32 : i32
    %1 = arith.extui %0 : i1 to i32
    %c0_i32_0 = arith.constant 0 : i32
    %2 = arith.cmpi ne, %1, %c0_i32_0 : i32
    scf.if %2 {
      %c0_21 = arith.constant 0 : index
      %c0_22 = arith.constant 0 : index
      %c0_23 = arith.constant 0 : index
      %37 = vector.load %arg2[%c0_21, %c0_22, %c0_23] : memref<1x16x32xf32, #tpu.memory_space<vmem>>, vector<1x16x32xf32>
      %38 = vector.shape_cast %37 : vector<1x16x32xf32> to vector<16x32xf32>
      %c0_24 = arith.constant 0 : index
      %c0_25 = arith.constant 0 : index
      %39 = vector.load %arg6[%c0_24, %c0_25] : memref<1x32xf32, #tpu.memory_space<vmem>>, vector<1x32xf32>
      %40 = vector.broadcast %39 : vector<1x32xf32> to vector<16x32xf32>
      %41 = arith.addf %38, %40 : vector<16x32xf32>
      %c0_26 = arith.constant 0 : index
      %c0_27 = arith.constant 0 : index
      %c0_28 = arith.constant 0 : index
      %42 = vector.load %arg7[%c0_26, %c0_27, %c0_28] : memref<1x16x32xf32, #tpu.memory_space<vmem>>, vector<1x16x32xf32>
      %43 = vector.shape_cast %42 : vector<1x16x32xf32> to vector<16x32xf32>
      %44 = vector.shape_cast %41 : vector<16x32xf32> to vector<1x16x32xf32>
      tpu.vector_store %arg7[%c0_26, %c0_27, %c0_28], %44 {strides = array<i32>} : memref<1x16x32xf32, #tpu.memory_space<vmem>>, vector<1x16x32xf32>,
    } else {
    }
    %c0 = arith.constant 0 : index
    %c0_1 = arith.constant 0 : index
    %c0_2 = arith.constant 0 : index
    %c0_3 = arith.constant 0 : index
    %3 = vector.load %arg3[%c0, %c0_1, %c0_2, %c0_3] : memref<1x1x16x12xbf16, #tpu.memory_space<vmem>>, vector<1x1x16x12xbf16>
    %4 = vector.shape_cast %3 : vector<1x1x16x12xbf16> to vector<16x12xbf16>
    %5 = vector.extract_strided_slice %4 {offsets = [0, 0], sizes = [16, 4], strides = [1, 1]} : vector<16x12xbf16> to vector<16x4xbf16>
    %6 = vector.extract_strided_slice %4 {offsets = [0, 4], sizes = [16, 4], strides = [1, 1]} : vector<16x12xbf16> to vector<16x4xbf16>
    %7 = vector.extract_strided_slice %4 {offsets = [0, 8], sizes = [16, 4], strides = [1, 1]} : vector<16x12xbf16> to vector<16x4xbf16>
    %cst = arith.constant dense<0.000000e+00> : vector<16x16xf32>
    %8 = tpu.matmul %5, %6, %cst {dimension_numbers = #tpu.dot_dimension_numbers<[1], [1], [0], [0], [0, 0, 1, 0], [], []>} : vector<16x4xbf16>, vector<16x4xbf16>, vector<16x16xf32> -> vector<16x16xf32>
    %cst_4 = arith.constant 5.000000e-01 : f32
    %9 = vector.broadcast %cst_4 : f32 to vector<16x16xf32>
    %10 = arith.mulf %8, %9 : vector<16x16xf32>
    %c0_5 = arith.constant 0 : index
    %c0_6 = arith.constant 0 : index
    %c0_7 = arith.constant 0 : index
    %11 = vector.load %arg4[%c0_5, %c0_6, %c0_7] : memref<1x1x16xf32, #tpu.memory_space<vmem>>, vector<1x1x16xf32>
    %12 = vector.shape_cast %11 : vector<1x1x16xf32> to vector<1x16xf32>
    %13 = vector.broadcast %12 : vector<1x16xf32> to vector<16x16xf32>
    %14 = arith.addf %10, %13 : vector<16x16xf32>
    %cst_8 = arith.constant dense<0xFF800000> : vector<16xf32>
    %15 = vector.multi_reduction <maximumf>, %14, %cst_8 [1] : vector<16x16xf32> to vector<16xf32>
    %16 = vector.shape_cast %15 : vector<16xf32> to vector<16x1xf32>
    %17 = vector.broadcast %16 : vector<16x1xf32> to vector<16x16xf32>
    %18 = arith.subf %14, %17 : vector<16x16xf32>
    %19 = math.exp %18 : vector<16x16xf32>
    %cst_9 = arith.constant dense<0.000000e+00> : vector<16xf32>
    %20 = vector.multi_reduction <add>, %19, %cst_9 [1] : vector<16x16xf32> to vector<16xf32>
    %21 = vector.shape_cast %20 : vector<16xf32> to vector<16x1xf32>
    %22 = tpu.reciprocal %21 {approx = true} : vector<16x1xf32> -> vector<16x1xf32>
    %23 = vector.broadcast %22 : vector<16x1xf32> to vector<16x16xf32>
    %24 = arith.mulf %19, %23 : vector<16x16xf32>
    %25 = arith.truncf %24 : vector<16x16xf32> to vector<16x16xbf16>
    %cst_10 = arith.constant dense<0.000000e+00> : vector<16x4xf32>
    %26 = tpu.matmul %25, %7, %cst_10 {dimension_numbers = #tpu.dot_dimension_numbers<[1], [0], [0], [1], [0, 0, 1, 1], [], []>} : vector<16x16xbf16>, vector<16x4xbf16>, vector<16x4xf32> -> vector<16x4xf32>
    %27 = arith.truncf %26 : vector<16x4xf32> to vector<16x4xbf16>
    %c0_11 = arith.constant 0 : index
    %c0_12 = arith.constant 0 : index
    %c0_13 = arith.constant 0 : index
    %28 = vector.load %arg5[%c0_11, %c0_12, %c0_13] : memref<1x4x32xbf16, #tpu.memory_space<vmem>>, vector<1x4x32xbf16>
    %29 = vector.shape_cast %28 : vector<1x4x32xbf16> to vector<4x32xbf16>
    %cst_14 = arith.constant dense<0.000000e+00> : vector<16x32xf32>
    %30 = tpu.matmul %27, %29, %cst_14 {dimension_numbers = #tpu.dot_dimension_numbers<[1], [0], [0], [1], [0, 0, 1, 1], [], []>} : vector<16x4xbf16>, vector<4x32xbf16>, vector<16x32xf32> -> vector<16x32xf32>
    %c0_15 = arith.constant 0 : index
    %c0_16 = arith.constant 0 : index
    %c0_17 = arith.constant 0 : index
    %31 = vector.load %arg7[%c0_15, %c0_16, %c0_17] : memref<1x16x32xf32, #tpu.memory_space<vmem>>, vector<1x16x32xf32>
    %32 = vector.shape_cast %31 : vector<1x16x32xf32> to vector<16x32xf32>
    %33 = arith.addf %32, %30 : vector<16x32xf32>
    %c0_18 = arith.constant 0 : index
    %c0_19 = arith.constant 0 : index
    %c0_20 = arith.constant 0 : index
    %34 = vector.load %arg7[%c0_18, %c0_19, %c0_20] : memref<1x16x32xf32, #tpu.memory_space<vmem>>, vector<1x16x32xf32>
    %35 = vector.shape_cast %34 : vector<1x16x32xf32> to vector<16x32xf32>
    %36 = vector.shape_cast %33 : vector<16x32xf32> to vector<1x16x32xf32>
    tpu.vector_store %arg7[%c0_18, %c0_19, %c0_20], %36 {strides = array<i32>} : memref<1x16x32xf32, #tpu.memory_space<vmem>>, vector<1x16x32xf32>,
    return
  }
  func.func @transform_0(%arg0: i32, %arg1: i32) -> (i32, i32, i32) {
    %c0_i32 = arith.constant 0 : i32
    %c0_i32_0 = arith.constant 0 : i32
    %c0_i32_1 = arith.constant 0 : i32
    return %arg0, %c0_i32, %c0_i32_0 : i32, i32, i32
  }
  func.func @transform_1(%arg0: i32, %arg1: i32) -> (i32, i32, i32, i32) {
    %c0_i32 = arith.constant 0 : i32
    %c0_i32_0 = arith.constant 0 : i32
    %c0_i32_1 = arith.constant 0 : i32
    return %arg0, %arg1, %c0_i32, %c0_i32_0 : i32, i32, i32, i32
  }
  func.func @transform_2(%arg0: i32, %arg1: i32) -> (i32, i32, i32) {
    %c0_i32 = arith.constant 0 : i32
    %c0_i32_0 = arith.constant 0 : i32
    %c0_i32_1 = arith.constant 0 : i32
    return %arg0, %c0_i32, %c0_i32_0 : i32, i32, i32
  }
  func.func @transform_3(%arg0: i32, %arg1: i32) -> (i32, i32, i32) {
    %c0_i32 = arith.constant 0 : i32
    %c0_i32_0 = arith.constant 0 : i32
    %c0_i32_1 = arith.constant 0 : i32
    return %arg1, %c0_i32, %c0_i32_0 : i32, i32, i32
  }
  func.func @transform_4(%arg0: i32, %arg1: i32) -> (i32, i32) {
    %c0_i32 = arith.constant 0 : i32
    %c0_i32_0 = arith.constant 0 : i32
    %c0_i32_1 = arith.constant 0 : i32
    return %c0_i32, %c0_i32_0 : i32, i32
  }
  func.func @transform_5(%arg0: i32, %arg1: i32) -> (i32, i32, i32) {
    %c0_i32 = arith.constant 0 : i32
    %c0_i32_0 = arith.constant 0 : i32
    %c0_i32_1 = arith.constant 0 : i32
    return %arg0, %c0_i32, %c0_i32_0 : i32, i32, i32
  }
}

module attributes {stable_mosaic.version = 11 : i64} {
  func.func @_ffn_kernel(%arg0: i32, %arg1: memref<32x32xf32, #tpu.memory_space<vmem>>, %arg2: memref<1x32xf32, #tpu.memory_space<vmem>>, %arg3: memref<1x32xf32, #tpu.memory_space<vmem>>, %arg4: memref<32x128xbf16, #tpu.memory_space<vmem>>, %arg5: memref<1x128xf32, #tpu.memory_space<vmem>>, %arg6: memref<128x32xbf16, #tpu.memory_space<vmem>>, %arg7: memref<1x32xf32, #tpu.memory_space<vmem>>, %arg8: memref<32x32xf32, #tpu.memory_space<vmem>>) attributes {dimension_semantics = [#tpu.dimension_semantics<parallel>], iteration_bounds = array<i64: 1>, scalar_prefetch = 0 : i64, scratch_operands = 0 : i64, tpu.core_type = #tpu.core_type<tc>, window_params = [{transform_indices = @transform_0, window_bounds = array<i64: 32, 32>}, {pipeline_mode = #tpu.pipeline_mode<synchronous>, transform_indices = @transform_1, window_bounds = array<i64: 1, 32>}, {pipeline_mode = #tpu.pipeline_mode<synchronous>, transform_indices = @transform_2, window_bounds = array<i64: 1, 32>}, {pipeline_mode = #tpu.pipeline_mode<synchronous>, transform_indices = @transform_3, window_bounds = array<i64: 32, 128>}, {pipeline_mode = #tpu.pipeline_mode<synchronous>, transform_indices = @transform_4, window_bounds = array<i64: 1, 128>}, {pipeline_mode = #tpu.pipeline_mode<synchronous>, transform_indices = @transform_5, window_bounds = array<i64: 128, 32>}, {pipeline_mode = #tpu.pipeline_mode<synchronous>, transform_indices = @transform_6, window_bounds = array<i64: 1, 32>}, {transform_indices = @transform_7, window_bounds = array<i64: 32, 32>}]} {
    %c0 = arith.constant 0 : index
    %c0_0 = arith.constant 0 : index
    %0 = vector.load %arg1[%c0, %c0_0] : memref<32x32xf32, #tpu.memory_space<vmem>>, vector<32x32xf32>
    %cst = arith.constant dense<0.000000e+00> : vector<32xf32>
    %1 = vector.multi_reduction <add>, %0, %cst [1] : vector<32x32xf32> to vector<32xf32>
    %2 = vector.shape_cast %1 : vector<32xf32> to vector<32x1xf32>
    %cst_1 = arith.constant 3.200000e+01 : f32
    %3 = vector.broadcast %cst_1 : f32 to vector<32x1xf32>
    %4 = arith.divf %2, %3 : vector<32x1xf32>
    %5 = vector.broadcast %4 : vector<32x1xf32> to vector<32x32xf32>
    %6 = arith.subf %0, %5 : vector<32x32xf32>
    %7 = arith.mulf %6, %6 : vector<32x32xf32>
    %cst_2 = arith.constant dense<0.000000e+00> : vector<32xf32>
    %8 = vector.multi_reduction <add>, %7, %cst_2 [1] : vector<32x32xf32> to vector<32xf32>
    %9 = vector.shape_cast %8 : vector<32xf32> to vector<32x1xf32>
    %cst_3 = arith.constant 3.200000e+01 : f32
    %10 = vector.broadcast %cst_3 : f32 to vector<32x1xf32>
    %11 = arith.divf %9, %10 : vector<32x1xf32>
    %12 = vector.broadcast %4 : vector<32x1xf32> to vector<32x32xf32>
    %13 = arith.subf %0, %12 : vector<32x32xf32>
    %cst_4 = arith.constant 9.99999974E-6 : f32
    %14 = vector.broadcast %cst_4 : f32 to vector<32x1xf32>
    %15 = arith.addf %11, %14 : vector<32x1xf32>
    %16 = math.rsqrt %15 : vector<32x1xf32>
    %17 = vector.broadcast %16 : vector<32x1xf32> to vector<32x32xf32>
    %18 = arith.mulf %13, %17 : vector<32x32xf32>
    %c0_5 = arith.constant 0 : index
    %c0_6 = arith.constant 0 : index
    %19 = vector.load %arg2[%c0_5, %c0_6] : memref<1x32xf32, #tpu.memory_space<vmem>>, vector<1x32xf32>
    %20 = vector.broadcast %19 : vector<1x32xf32> to vector<32x32xf32>
    %21 = arith.mulf %18, %20 : vector<32x32xf32>
    %c0_7 = arith.constant 0 : index
    %c0_8 = arith.constant 0 : index
    %22 = vector.load %arg3[%c0_7, %c0_8] : memref<1x32xf32, #tpu.memory_space<vmem>>, vector<1x32xf32>
    %23 = vector.broadcast %22 : vector<1x32xf32> to vector<32x32xf32>
    %24 = arith.addf %21, %23 : vector<32x32xf32>
    %25 = arith.truncf %24 : vector<32x32xf32> to vector<32x32xbf16>
    %c0_9 = arith.constant 0 : index
    %c0_10 = arith.constant 0 : index
    %26 = vector.load %arg4[%c0_9, %c0_10] : memref<32x128xbf16, #tpu.memory_space<vmem>>, vector<32x128xbf16>
    %cst_11 = arith.constant dense<0.000000e+00> : vector<32x128xf32>
    %27 = tpu.matmul %25, %26, %cst_11 {dimension_numbers = #tpu.dot_dimension_numbers<[1], [0], [0], [1], [0, 0, 1, 1], [], []>} : vector<32x32xbf16>, vector<32x128xbf16>, vector<32x128xf32> -> vector<32x128xf32>
    %c0_12 = arith.constant 0 : index
    %c0_13 = arith.constant 0 : index
    %28 = vector.load %arg5[%c0_12, %c0_13] : memref<1x128xf32, #tpu.memory_space<vmem>>, vector<1x128xf32>
    %29 = vector.broadcast %28 : vector<1x128xf32> to vector<32x128xf32>
    %30 = arith.addf %27, %29 : vector<32x128xf32>
    %cst_14 = arith.constant 0.000000e+00 : f32
    %31 = vector.broadcast %cst_14 : f32 to vector<32x128xf32>
    %32 = arith.cmpf ogt, %30, %31 : vector<32x128xf32>
    %cst_15 = arith.constant 0.00999999977 : f32
    %33 = vector.broadcast %cst_15 : f32 to vector<32x128xf32>
    %34 = arith.mulf %33, %30 : vector<32x128xf32>
    %35 = arith.select %32, %30, %34 : vector<32x128xi1>, vector<32x128xf32>
    %36 = arith.truncf %35 : vector<32x128xf32> to vector<32x128xbf16>
    %c0_16 = arith.constant 0 : index
    %c0_17 = arith.constant 0 : index
    %37 = vector.load %arg6[%c0_16, %c0_17] : memref<128x32xbf16, #tpu.memory_space<vmem>>, vector<128x32xbf16>
    %cst_18 = arith.constant dense<0.000000e+00> : vector<32x32xf32>
    %38 = tpu.matmul %36, %37, %cst_18 {dimension_numbers = #tpu.dot_dimension_numbers<[1], [0], [0], [1], [0, 0, 1, 1], [], []>} : vector<32x128xbf16>, vector<128x32xbf16>, vector<32x32xf32> -> vector<32x32xf32>
    %c0_19 = arith.constant 0 : index
    %c0_20 = arith.constant 0 : index
    %39 = vector.load %arg7[%c0_19, %c0_20] : memref<1x32xf32, #tpu.memory_space<vmem>>, vector<1x32xf32>
    %40 = vector.broadcast %39 : vector<1x32xf32> to vector<32x32xf32>
    %41 = arith.addf %38, %40 : vector<32x32xf32>
    %42 = arith.addf %0, %41 : vector<32x32xf32>
    %c0_21 = arith.constant 0 : index
    %c0_22 = arith.constant 0 : index
    %43 = vector.load %arg8[%c0_21, %c0_22] : memref<32x32xf32, #tpu.memory_space<vmem>>, vector<32x32xf32>
    tpu.vector_store %arg8[%c0_21, %c0_22], %42 {strides = array<i32>} : memref<32x32xf32, #tpu.memory_space<vmem>>, vector<32x32xf32>,
    return
  }
  func.func @transform_0(%arg0: i32) -> (i32, i32) {
    %c0_i32 = arith.constant 0 : i32
    %c0_i32_0 = arith.constant 0 : i32
    return %arg0, %c0_i32 : i32, i32
  }
  func.func @transform_1(%arg0: i32) -> (i32, i32) {
    %c0_i32 = arith.constant 0 : i32
    %c0_i32_0 = arith.constant 0 : i32
    %c0_i32_1 = arith.constant 0 : i32
    return %c0_i32, %c0_i32_0 : i32, i32
  }
  func.func @transform_2(%arg0: i32) -> (i32, i32) {
    %c0_i32 = arith.constant 0 : i32
    %c0_i32_0 = arith.constant 0 : i32
    %c0_i32_1 = arith.constant 0 : i32
    return %c0_i32, %c0_i32_0 : i32, i32
  }
  func.func @transform_3(%arg0: i32) -> (i32, i32) {
    %c0_i32 = arith.constant 0 : i32
    %c0_i32_0 = arith.constant 0 : i32
    %c0_i32_1 = arith.constant 0 : i32
    return %c0_i32, %c0_i32_0 : i32, i32
  }
  func.func @transform_4(%arg0: i32) -> (i32, i32) {
    %c0_i32 = arith.constant 0 : i32
    %c0_i32_0 = arith.constant 0 : i32
    %c0_i32_1 = arith.constant 0 : i32
    return %c0_i32, %c0_i32_0 : i32, i32
  }
  func.func @transform_5(%arg0: i32) -> (i32, i32) {
    %c0_i32 = arith.constant 0 : i32
    %c0_i32_0 = arith.constant 0 : i32
    %c0_i32_1 = arith.constant 0 : i32
    return %c0_i32, %c0_i32_0 : i32, i32
  }
  func.func @transform_6(%arg0: i32) -> (i32, i32) {
    %c0_i32 = arith.constant 0 : i32
    %c0_i32_0 = arith.constant 0 : i32
    %c0_i32_1 = arith.constant 0 : i32
    return %c0_i32, %c0_i32_0 : i32, i32
  }
  func.func @transform_7(%arg0: i32) -> (i32, i32) {
    %c0_i32 = arith.constant 0 : i32
    %c0_i32_0 = arith.constant 0 : i32
    return %arg0, %c0_i32 : i32, i32
  }
}

module attributes {stable_mosaic.version = 11 : i64} {
  func.func @_ln_vocab_ce_kernel(%arg0: i32, %arg1: i32, %arg2: memref<32x32xf32, #tpu.memory_space<vmem>>, %arg3: memref<1x32xf32, #tpu.memory_space<vmem>>, %arg4: memref<1x32xf32, #tpu.memory_space<vmem>>, %arg5: memref<64x32xbf16, #tpu.memory_space<vmem>>, %arg6: memref<1x64xf32, #tpu.memory_space<vmem>>, %arg7: memref<32x1xi32, #tpu.memory_space<vmem>>, %arg8: memref<32x1xf32, #tpu.memory_space<vmem>>, %arg9: memref<32x32xf32, #tpu.memory_space<vmem>>, %arg10: memref<32x32xbf16, #tpu.memory_space<vmem>>, %arg11: memref<32x1xf32, #tpu.memory_space<vmem>>, %arg12: memref<32x1xf32, #tpu.memory_space<vmem>>, %arg13: memref<32x1xf32, #tpu.memory_space<vmem>>) attributes {dimension_semantics = [#tpu.dimension_semantics<parallel>, #tpu.dimension_semantics<arbitrary>], iteration_bounds = array<i64: 1, 1>, scalar_prefetch = 0 : i64, scratch_operands = 4 : i64, tpu.core_type = #tpu.core_type<tc>, window_params = [{transform_indices = @transform_0, window_bounds = array<i64: 32, 32>}, {pipeline_mode = #tpu.pipeline_mode<synchronous>, transform_indices = @transform_1, window_bounds = array<i64: 1, 32>}, {pipeline_mode = #tpu.pipeline_mode<synchronous>, transform_indices = @transform_2, window_bounds = array<i64: 1, 32>}, {transform_indices = @transform_3, window_bounds = array<i64: 64, 32>}, {transform_indices = @transform_4, window_bounds = array<i64: 1, 64>}, {transform_indices = @transform_5, window_bounds = array<i64: 32, 1>}, {transform_indices = @transform_6, window_bounds = array<i64: 32, 1>}, {transform_indices = @transform_7, window_bounds = array<i64: 32, 32>}]} {
    %c0_i32 = arith.constant 0 : i32
    %0 = arith.cmpi eq, %arg1, %c0_i32 : i32
    %1 = arith.extui %0 : i1 to i32
    %c0_i32_0 = arith.constant 0 : i32
    %2 = arith.cmpi ne, %1, %c0_i32_0 : i32
    scf.if %2 {
      %c0_28 = arith.constant 0 : index
      %c0_29 = arith.constant 0 : index
      %43 = vector.load %arg2[%c0_28, %c0_29] : memref<32x32xf32, #tpu.memory_space<vmem>>, vector<32x32xf32>
      %cst_30 = arith.constant dense<0.000000e+00> : vector<32xf32>
      %44 = vector.multi_reduction <add>, %43, %cst_30 [1] : vector<32x32xf32> to vector<32xf32>
      %45 = vector.shape_cast %44 : vector<32xf32> to vector<32x1xf32>
      %cst_31 = arith.constant 3.200000e+01 : f32
      %46 = vector.broadcast %cst_31 : f32 to vector<32x1xf32>
      %47 = arith.divf %45, %46 : vector<32x1xf32>
      %48 = vector.broadcast %47 : vector<32x1xf32> to vector<32x32xf32>
      %49 = arith.subf %43, %48 : vector<32x32xf32>
      %50 = arith.mulf %49, %49 : vector<32x32xf32>
      %cst_32 = arith.constant dense<0.000000e+00> : vector<32xf32>
      %51 = vector.multi_reduction <add>, %50, %cst_32 [1] : vector<32x32xf32> to vector<32xf32>
      %52 = vector.shape_cast %51 : vector<32xf32> to vector<32x1xf32>
      %cst_33 = arith.constant 3.200000e+01 : f32
      %53 = vector.broadcast %cst_33 : f32 to vector<32x1xf32>
      %54 = arith.divf %52, %53 : vector<32x1xf32>
      %55 = vector.broadcast %47 : vector<32x1xf32> to vector<32x32xf32>
      %56 = arith.subf %43, %55 : vector<32x32xf32>
      %cst_34 = arith.constant 9.99999974E-6 : f32
      %57 = vector.broadcast %cst_34 : f32 to vector<32x1xf32>
      %58 = arith.addf %54, %57 : vector<32x1xf32>
      %59 = math.rsqrt %58 : vector<32x1xf32>
      %60 = vector.broadcast %59 : vector<32x1xf32> to vector<32x32xf32>
      %61 = arith.mulf %56, %60 : vector<32x32xf32>
      %c0_35 = arith.constant 0 : index
      %c0_36 = arith.constant 0 : index
      %62 = vector.load %arg3[%c0_35, %c0_36] : memref<1x32xf32, #tpu.memory_space<vmem>>, vector<1x32xf32>
      %63 = vector.broadcast %62 : vector<1x32xf32> to vector<32x32xf32>
      %64 = arith.mulf %61, %63 : vector<32x32xf32>
      %c0_37 = arith.constant 0 : index
      %c0_38 = arith.constant 0 : index
      %65 = vector.load %arg4[%c0_37, %c0_38] : memref<1x32xf32, #tpu.memory_space<vmem>>, vector<1x32xf32>
      %66 = vector.broadcast %65 : vector<1x32xf32> to vector<32x32xf32>
      %67 = arith.addf %64, %66 : vector<32x32xf32>
      %c0_39 = arith.constant 0 : index
      %c0_40 = arith.constant 0 : index
      %68 = vector.load %arg9[%c0_39, %c0_40] : memref<32x32xf32, #tpu.memory_space<vmem>>, vector<32x32xf32>
      tpu.vector_store %arg9[%c0_39, %c0_40], %67 {strides = array<i32>} : memref<32x32xf32, #tpu.memory_space<vmem>>, vector<32x32xf32>,
      %69 = arith.truncf %67 : vector<32x32xf32> to vector<32x32xbf16>
      %c0_41 = arith.constant 0 : index
      %c0_42 = arith.constant 0 : index
      %70 = vector.load %arg10[%c0_41, %c0_42] : memref<32x32xbf16, #tpu.memory_space<vmem>>, vector<32x32xbf16>
      tpu.vector_store %arg10[%c0_41, %c0_42], %69 {strides = array<i32>} : memref<32x32xbf16, #tpu.memory_space<vmem>>, vector<32x32xbf16>,
      %cst_43 = arith.constant 0xFF800000 : f32
      %71 = vector.broadcast %cst_43 : f32 to vector<32x1xf32>
      %c0_44 = arith.constant 0 : index
      %c0_45 = arith.constant 0 : index
      %72 = vector.load %arg11[%c0_44, %c0_45] : memref<32x1xf32, #tpu.memory_space<vmem>>, vector<32x1xf32>
      tpu.vector_store %arg11[%c0_44, %c0_45], %71 {strides = array<i32>} : memref<32x1xf32, #tpu.memory_space<vmem>>, vector<32x1xf32>,
      %cst_46 = arith.constant 0.000000e+00 : f32
      %73 = vector.broadcast %cst_46 : f32 to vector<32x1xf32>
      %c0_47 = arith.constant 0 : index
      %c0_48 = arith.constant 0 : index
      %74 = vector.load %arg12[%c0_47, %c0_48] : memref<32x1xf32, #tpu.memory_space<vmem>>, vector<32x1xf32>
      tpu.vector_store %arg12[%c0_47, %c0_48], %73 {strides = array<i32>} : memref<32x1xf32, #tpu.memory_space<vmem>>, vector<32x1xf32>,
      %cst_49 = arith.constant 0.000000e+00 : f32
      %75 = vector.broadcast %cst_49 : f32 to vector<32x1xf32>
      %c0_50 = arith.constant 0 : index
      %c0_51 = arith.constant 0 : index
      %76 = vector.load %arg13[%c0_50, %c0_51] : memref<32x1xf32, #tpu.memory_space<vmem>>, vector<32x1xf32>
      tpu.vector_store %arg13[%c0_50, %c0_51], %75 {strides = array<i32>} : memref<32x1xf32, #tpu.memory_space<vmem>>, vector<32x1xf32>,
    } else {
    }
    %c0 = arith.constant 0 : index
    %c0_1 = arith.constant 0 : index
    %3 = vector.load %arg10[%c0, %c0_1] : memref<32x32xbf16, #tpu.memory_space<vmem>>, vector<32x32xbf16>
    %c0_2 = arith.constant 0 : index
    %c0_3 = arith.constant 0 : index
    %4 = vector.load %arg5[%c0_2, %c0_3] : memref<64x32xbf16, #tpu.memory_space<vmem>>, vector<64x32xbf16>
    %cst = arith.constant dense<0.000000e+00> : vector<32x64xf32>
    %5 = tpu.matmul %3, %4, %cst {dimension_numbers = #tpu.dot_dimension_numbers<[1], [1], [0], [0], [0, 0, 1, 0], [], []>} : vector<32x32xbf16>, vector<64x32xbf16>, vector<32x64xf32> -> vector<32x64xf32>
    %c0_4 = arith.constant 0 : index
    %c0_5 = arith.constant 0 : index
    %6 = vector.load %arg6[%c0_4, %c0_5] : memref<1x64xf32, #tpu.memory_space<vmem>>, vector<1x64xf32>
    %7 = vector.broadcast %6 : vector<1x64xf32> to vector<32x64xf32>
    %8 = arith.addf %5, %7 : vector<32x64xf32>
    %c0_6 = arith.constant 0 : index
    %c0_7 = arith.constant 0 : index
    %9 = vector.load %arg7[%c0_6, %c0_7] : memref<32x1xi32, #tpu.memory_space<vmem>>, vector<32x1xi32>
    %c64_i32 = arith.constant 64 : i32
    %10 = arith.muli %arg1, %c64_i32 : i32
    %11 = tpu.iota {dimensions = array<i32: 1>} : vector<32x64xi32>
    %12 = vector.broadcast %10 : i32 to vector<32x64xi32>
    %13 = arith.addi %12, %11 : vector<32x64xi32>
    %c0_8 = arith.constant 0 : index
    %c0_9 = arith.constant 0 : index
    %14 = vector.load %arg13[%c0_8, %c0_9] : memref<32x1xf32, #tpu.memory_space<vmem>>, vector<32x1xf32>
    %15 = vector.broadcast %9 : vector<32x1xi32> to vector<32x64xi32>
    %16 = arith.cmpi eq, %13, %15 : vector<32x64xi32>
    %cst_10 = arith.constant 0.000000e+00 : f32
    %17 = vector.broadcast %cst_10 : f32 to vector<32x64xf32>
    %18 = arith.select %16, %8, %17 : vector<32x64xi1>, vector<32x64xf32>
    %cst_11 = arith.constant dense<0.000000e+00> : vector<32xf32>
    %19 = vector.multi_reduction <add>, %18, %cst_11 [1] : vector<32x64xf32> to vector<32xf32>
    %20 = vector.shape_cast %19 : vector<32xf32> to vector<32x1xf32>
    %21 = arith.addf %14, %20 : vector<32x1xf32>
    %c0_12 = arith.constant 0 : index
    %c0_13 = arith.constant 0 : index
    %22 = vector.load %arg13[%c0_12, %c0_13] : memref<32x1xf32, #tpu.memory_space<vmem>>, vector<32x1xf32>
    tpu.vector_store %arg13[%c0_12, %c0_13], %21 {strides = array<i32>} : memref<32x1xf32, #tpu.memory_space<vmem>>, vector<32x1xf32>,
    %c0_14 = arith.constant 0 : index
    %c0_15 = arith.constant 0 : index
    %23 = vector.load %arg11[%c0_14, %c0_15] : memref<32x1xf32, #tpu.memory_space<vmem>>, vector<32x1xf32>
    %cst_16 = arith.constant dense<0xFF800000> : vector<32xf32>
    %24 = vector.multi_reduction <maximumf>, %8, %cst_16 [1] : vector<32x64xf32> to vector<32xf32>
    %25 = vector.shape_cast %24 : vector<32xf32> to vector<32x1xf32>
    %26 = arith.maximumf %23, %25 : vector<32x1xf32>
    %c0_17 = arith.constant 0 : index
    %c0_18 = arith.constant 0 : index
    %27 = vector.load %arg12[%c0_17, %c0_18] : memref<32x1xf32, #tpu.memory_space<vmem>>, vector<32x1xf32>
    %c0_19 = arith.constant 0 : index
    %c0_20 = arith.constant 0 : index
    %28 = vector.load %arg11[%c0_19, %c0_20] : memref<32x1xf32, #tpu.memory_space<vmem>>, vector<32x1xf32>
    %29 = arith.subf %28, %26 : vector<32x1xf32>
    %30 = math.exp %29 : vector<32x1xf32>
    %31 = arith.mulf %27, %30 : vector<32x1xf32>
    %32 = vector.broadcast %26 : vector<32x1xf32> to vector<32x64xf32>
    %33 = arith.subf %8, %32 : vector<32x64xf32>
    %34 = math.exp %33 : vector<32x64xf32>
    %cst_21 = arith.constant dense<0.000000e+00> : vector<32xf32>
    %35 = vector.multi_reduction <add>, %34, %cst_21 [1] : vector<32x64xf32> to vector<32xf32>
    %36 = vector.shape_cast %35 : vector<32xf32> to vector<32x1xf32>
    %37 = arith.addf %31, %36 : vector<32x1xf32>
    %c0_22 = arith.constant 0 : index
    %c0_23 = arith.constant 0 : index
    %38 = vector.load %arg12[%c0_22, %c0_23] : memref<32x1xf32, #tpu.memory_space<vmem>>, vector<32x1xf32>
    tpu.vector_store %arg12[%c0_22, %c0_23], %37 {strides = array<i32>} : memref<32x1xf32, #tpu.memory_space<vmem>>, vector<32x1xf32>,
    %c0_24 = arith.constant 0 : index
    %c0_25 = arith.constant 0 : index
    %39 = vector.load %arg11[%c0_24, %c0_25] : memref<32x1xf32, #tpu.memory_space<vmem>>, vector<32x1xf32>
    tpu.vector_store %arg11[%c0_24, %c0_25], %26 {strides = array<i32>} : memref<32x1xf32, #tpu.memory_space<vmem>>, vector<32x1xf32>,
    %c0_i32_26 = arith.constant 0 : i32
    %40 = arith.cmpi eq, %arg1, %c0_i32_26 : i32
    %41 = arith.extui %40 : i1 to i32
    %c0_i32_27 = arith.constant 0 : i32
    %42 = arith.cmpi ne, %41, %c0_i32_27 : i32
    scf.if %42 {
      %c0_28 = arith.constant 0 : index
      %c0_29 = arith.constant 0 : index
      %43 = vector.load %arg11[%c0_28, %c0_29] : memref<32x1xf32, #tpu.memory_space<vmem>>, vector<32x1xf32>
      %c0_30 = arith.constant 0 : index
      %c0_31 = arith.constant 0 : index
      %44 = vector.load %arg12[%c0_30, %c0_31] : memref<32x1xf32, #tpu.memory_space<vmem>>, vector<32x1xf32>
      %45 = math.log %44 : vector<32x1xf32>
      %46 = arith.addf %43, %45 : vector<32x1xf32>
      %c0_i32_32 = arith.constant 0 : i32
      %47 = vector.broadcast %c0_i32_32 : i32 to vector<32x1xi32>
      %48 = arith.cmpi ne, %9, %47 : vector<32x1xi32>
      %c0_33 = arith.constant 0 : index
      %c0_34 = arith.constant 0 : index
      %49 = vector.load %arg13[%c0_33, %c0_34] : memref<32x1xf32, #tpu.memory_space<vmem>>, vector<32x1xf32>
      %50 = arith.subf %46, %49 : vector<32x1xf32>
      %cst_35 = arith.constant 0.000000e+00 : f32
      %51 = vector.broadcast %cst_35 : f32 to vector<32x1xf32>
      %52 = arith.select %48, %50, %51 : vector<32x1xi1>, vector<32x1xf32>
      %c0_36 = arith.constant 0 : index
      %c0_37 = arith.constant 0 : index
      %53 = vector.load %arg8[%c0_36, %c0_37] : memref<32x1xf32, #tpu.memory_space<vmem>>, vector<32x1xf32>
      tpu.vector_store %arg8[%c0_36, %c0_37], %52 {strides = array<i32>} : memref<32x1xf32, #tpu.memory_space<vmem>>, vector<32x1xf32>,
    } else {
    }
    return
  }
  func.func @transform_0(%arg0: i32, %arg1: i32) -> (i32, i32) {
    %c0_i32 = arith.constant 0 : i32
    %c0_i32_0 = arith.constant 0 : i32
    return %arg0, %c0_i32 : i32, i32
  }
  func.func @transform_1(%arg0: i32, %arg1: i32) -> (i32, i32) {
    %c0_i32 = arith.constant 0 : i32
    %c0_i32_0 = arith.constant 0 : i32
    %c0_i32_1 = arith.constant 0 : i32
    return %c0_i32, %c0_i32_0 : i32, i32
  }
  func.func @transform_2(%arg0: i32, %arg1: i32) -> (i32, i32) {
    %c0_i32 = arith.constant 0 : i32
    %c0_i32_0 = arith.constant 0 : i32
    %c0_i32_1 = arith.constant 0 : i32
    return %c0_i32, %c0_i32_0 : i32, i32
  }
  func.func @transform_3(%arg0: i32, %arg1: i32) -> (i32, i32) {
    %c0_i32 = arith.constant 0 : i32
    %c0_i32_0 = arith.constant 0 : i32
    return %arg1, %c0_i32 : i32, i32
  }
  func.func @transform_4(%arg0: i32, %arg1: i32) -> (i32, i32) {
    %c0_i32 = arith.constant 0 : i32
    %c0_i32_0 = arith.constant 0 : i32
    return %c0_i32, %arg1 : i32, i32
  }
  func.func @transform_5(%arg0: i32, %arg1: i32) -> (i32, i32) {
    %c0_i32 = arith.constant 0 : i32
    %c0_i32_0 = arith.constant 0 : i32
    return %arg0, %c0_i32 : i32, i32
  }
  func.func @transform_6(%arg0: i32, %arg1: i32) -> (i32, i32) {
    %c0_i32 = arith.constant 0 : i32
    %c0_i32_0 = arith.constant 0 : i32
    return %arg0, %c0_i32 : i32, i32
  }
  func.func @transform_7(%arg0: i32, %arg1: i32) -> (i32, i32) {
    %c0_i32 = arith.constant 0 : i32
    %c0_i32_0 = arith.constant 0 : i32
    return %arg0, %c0_i32 : i32, i32
  }
}

</mosaic_0001>

<llo_original>
// kernel: tpu_custom_call.1
$region0: #{tpu_custom_call.1}
  #allocation0 [shape = 'u32[]', space=smem, size = 0x4, offset = 0x4, fixed_abs, tag = 'smem constant byte address 0x4 - core index']
  #allocation1 [shape = 'u32[144,128]{1,0:T(1,128)}', space=vmem, size = 0x12000, scoped, tag = 'internal scratch']
  %s0 = inlined_call_operand.hbm [shape: f32[8,128], index: 0, kind: input, shape index: {}]
  %s1 = inlined_call_operand.hbm [shape: f32[8,128], index: 1, kind: output, shape index: {}]
  %s2 = sld [smem:[#allocation0]]
  $region41: #{tpu_custom_call.1} parent=0
    _
  %s4 = ssub.s32 1, %s2
  %s5 = scalar_select 0, %s4, %s2
  $region1: #{tpu_custom_call.1} parent=0
    #allocation2 [shape = 'u8[4096]{0}', space=vmem, size = 0x1000, scoped, tag = 'input window, operand 0, single buffered']
    #allocation3 [shape = 's32[2]{0}', space=sflag, size = 0x8, scoped, tag = 'scoped memory for tpu_custom_call.1']
    #allocation4 [shape = 's32[2]{0}', space=sflag, size = 0x8, scoped, tag = 'scoped memory for tpu_custom_call.1']
    #allocation5 [shape = 'u8[4096]{0}', space=vmem, size = 0x1000, scoped, tag = 'output window, operand 0, single buffered']
    %6 = vsyncpa [#allocation3], 0
    %7 = vsyncpa [#allocation4], 0
    loop: start=0, step=1, limit=4
    $region2: #{tpu_custom_call.1} parent=1 // loop_pre_header
      _
    $region3: #{tpu_custom_call.1} parent=1 // loop_header
      %s9 = sphi 0, %s13
      %p10 = scmp.ge.s32.totalorder %s9, 4
      %s17 = sphi 0, %s17
      %s19 = sphi 0, %s17
      %s20 = sphi 0, %s19
      %s34 = sphi 0, %s20
      %s38 = sphi 0, %s38
      %s40 = sphi 0, %s38
      %s41 = sphi 0, %s40
      %s55 = sphi 0, %s41
    $region4: #{tpu_custom_call.1} parent=1 // loop_header_branch
      %12 = sbr.rel (%p10) target = $region8
    $region5: #{tpu_custom_call.1} parent=1 // loop_body
      %s14 = ssub.s32 %s9, 1
      %s15 = ssub.s32 %s9, 2
      %s16 = sadd.s32 %s9, 1
      %s18 = sadd.s32 %s17, 1
      %p21 = scmp.eq.s32.totalorder %s9, 1
      %p22 = scmp.ne.s32.totalorder %s17, %s19
      %p23 = scmp.eq.s32.totalorder %s9, 0
      %p24 = por %p22, %p23
      %p25 = scmp.ne.s32.totalorder %s17, %s19
      %p26 = scmp.eq.s32.totalorder %s14, 1
      %p27 = por %p25, %p26
      %p28 = scmp.ne.s32.totalorder %s19, %s20
      %p29 = scmp.eq.s32.totalorder %s14, 0
      %p30 = por %p28, %p29
      %p31 = scmp.ne.s32.totalorder %s19, %s20
      %p32 = scmp.eq.s32.totalorder %s15, 1
      %p33 = por %p31, %p32
      %p35 = scmp.ne.s32.totalorder %s20, %s34
      %p36 = scmp.eq.s32.totalorder %s15, 0
      %p37 = por %p35, %p36
      %s39 = sadd.s32 %s38, 1
      %p42 = scmp.eq.s32.totalorder %s9, 1
      %p43 = scmp.ne.s32.totalorder %s38, %s40
      %p44 = scmp.eq.s32.totalorder %s9, 0
      %p45 = por %p43, %p44
      %p46 = scmp.ne.s32.totalorder %s38, %s40
      %p47 = scmp.eq.s32.totalorder %s14, 1
      %p48 = por %p46, %p47
      %p49 = scmp.ne.s32.totalorder %s40, %s41
      %p50 = scmp.eq.s32.totalorder %s14, 0
      %p51 = por %p49, %p50
      %p52 = scmp.ne.s32.totalorder %s40, %s41
      %p53 = scmp.eq.s32.totalorder %s15, 1
      %p54 = por %p52, %p53
      %p56 = scmp.ne.s32.totalorder %s41, %s55
      %p57 = scmp.eq.s32.totalorder %s15, 0
      %p58 = por %p56, %p57
      %p59 = scmp.le.s32.totalorder 1, %s9
      %p60 = scmp.lt.s32.totalorder %s9, 3
      %p61 = pnand %p59, %p60
      %p62 = pneg %p61
      // Predicated region
      $region9: #{tpu_custom_call.1} parent=5 // pred_check
        _
      $region10: #{tpu_custom_call.1} parent=5 // pred_check_branch
        %64 = sbr.rel (%p61) target = $region12
      $region11: #{tpu_custom_call.1} parent=5 // pred_region
        %s65 = ssub.s32 %s9, 1
        // Predicated region
        $region13: #{tpu_custom_call.1} parent=11 // pred_check
          %p66 = pneg %p30
        $region14: #{tpu_custom_call.1} parent=11 // pred_check_branch
          %68 = sbr.rel (%p66) target = $region16
        $region15: #{tpu_custom_call.1} parent=11 // pred_region
          %s70 = ssub.s32 128, 128
          %71 = vsyncadd [#allocation3], %s70
          %s73 = sshll.u32 [#allocation2], 4
          %s74 = int_to_ptr.vmem [resolvable:$true] %s73
          %76 = dma.hbm_to_vmem [thread:$0]  %s0, 128, %s74, [#allocation3]
        $region16: #{tpu_custom_call.1} parent=11 // pred_fallthru
          _
      $region12: #{tpu_custom_call.1} parent=5 // pred_fallthru
        _
      %p77 = scmp.lt.s32.totalorder %s9, 2
      // Predicated region
      $region17: #{tpu_custom_call.1} parent=5 // pred_check
        %p78 = pneg %p77
      $region18: #{tpu_custom_call.1} parent=5 // pred_check_branch
        %80 = sbr.rel (%p78) target = $region20
      $region19: #{tpu_custom_call.1} parent=5 // pred_region
        _
      $region20: #{tpu_custom_call.1} parent=5 // pred_fallthru
        _
      %p81 = scmp.le.s32.totalorder 1, %s9
      %p82 = scmp.lt.s32.totalorder %s9, 3
      %p83 = pnand %p81, %p82
      %p84 = pneg %p83
      // Predicated region
      $region21: #{tpu_custom_call.1} parent=5 // pred_check
        _
      $region22: #{tpu_custom_call.1} parent=5 // pred_check_branch
        %86 = sbr.rel (%p83) target = $region24
      $region23: #{tpu_custom_call.1} parent=5 // pred_region
        %s87 = ssub.s32 %s9, 1
        // Predicated region
        $region25: #{tpu_custom_call.1} parent=23 // pred_check
          %p88 = pneg %p30
        $region26: #{tpu_custom_call.1} parent=23 // pred_check_branch
          %90 = sbr.rel (%p88) target = $region28
        $region27: #{tpu_custom_call.1} parent=23 // pred_region
          %91 = dma.done [#allocation3], 128
        $region28: #{tpu_custom_call.1} parent=23 // pred_fallthru
          _
        %p92 = pneg %p30
        %p93 = pneg %p27
        %p94 = pneg %p51
        %p95 = pneg %p48
        %v96 = vld [vmem:[#allocation2] sm:$0xff]
        %v97 = vmul.f32 %v96, 2.0
        %98 = vst [vmem:[#allocation5] sm:$0xff] %v97
        // Predicated region
        $region29: #{tpu_custom_call.1} parent=23 // pred_check
          %p99 = pneg %p48
        $region30: #{tpu_custom_call.1} parent=23 // pred_check_branch
          %101 = sbr.rel (%p99) target = $region32
        $region31: #{tpu_custom_call.1} parent=23 // pred_region
          %s103 = ssub.s32 128, 128
          %104 = vsyncadd [#allocation4], %s103
          %s106 = sshll.u32 [#allocation5], 4
          %s107 = int_to_ptr.vmem [resolvable:$true] %s106
          %109 = dma.vmem_to_hbm [thread:$0]  %s107, 128, %s1, [#allocation4]
        $region32: #{tpu_custom_call.1} parent=23 // pred_fallthru
          _
        // Predicated region
        $region33: #{tpu_custom_call.1} parent=23 // pred_check
          %p110 = pneg %p48
        $region34: #{tpu_custom_call.1} parent=23 // pred_check_branch
          %112 = sbr.rel (%p110) target = $region36
        $region35: #{tpu_custom_call.1} parent=23 // pred_region
          %113 = dma.done [#allocation4], 128
        $region36: #{tpu_custom_call.1} parent=23 // pred_fallthru
          _
      $region24: #{tpu_custom_call.1} parent=5 // pred_fallthru
        _
      %p114 = scmp.le.s32.totalorder 2, %s9
      // Predicated region
      $region37: #{tpu_custom_call.1} parent=5 // pred_check
        %p115 = pneg %p114
      $region38: #{tpu_custom_call.1} parent=5 // pred_check_branch
        %117 = sbr.rel (%p115) target = $region40
      $region39: #{tpu_custom_call.1} parent=5 // pred_region
        %s118 = ssub.s32 %s9, 2
      $region40: #{tpu_custom_call.1} parent=5 // pred_fallthru
        _
    $region6: #{tpu_custom_call.1} parent=1 // loop_footer
      %s13 = sadd.s32 1, %s9
    $region7: #{tpu_custom_call.1} parent=1 // loop_footer_branch
      %8 = sbr.rel target = $region3
    $region8: #{tpu_custom_call.1} parent=1 // loop_exit
      _
    %119 = vsyncpa [#allocation3], 1
    %s120 = scalar_lea.sflag [#allocation3], 1
    %121 = vsyncpa %s120, 1
    %122 = vsyncpa [#allocation4], 1
    %s123 = scalar_lea.sflag [#allocation4], 1
    %124 = vsyncpa %s123, 1

// kernel: transformer_forward.7
$region0: #{transformer_forward.7}
  #allocation0 [shape = 'u32[]', space=smem, size = 0x4, offset = 0x4, fixed_abs, tag = 'smem constant byte address 0x4 - core index']
  #allocation1 [shape = 'u32[144,128]{1,0:T(1,128)}', space=vmem, size = 0x12000, scoped, tag = 'internal scratch']
  %s0 = inlined_call_operand.vmem [shape: f32[2,16,32], index: 0, kind: input, shape index: {}]
  %s1 = inlined_call_operand.vmem [shape: f32[1,32], index: 1, kind: input, shape index: {}]
  %s2 = inlined_call_operand.vmem [shape: f32[1,32], index: 2, kind: input, shape index: {}]
  %s3 = inlined_call_operand.vmem [shape: bf16[8,32,12], index: 3, kind: input, shape index: {}]
  %s4 = inlined_call_operand.vmem [shape: f32[8,1,12], index: 4, kind: input, shape index: {}]
  %s5 = inlined_call_operand.vmem [shape: bf16[2,8,16,12], index: 5, kind: output, shape index: {}]
  %s6 = sld [smem:[#allocation0]]
  $region53: #{transformer_forward.7} parent=0
    _
  %s8 = ssub.s32 1, %s6
  %s9 = scalar_select 0, %s8, %s6
  loop: start=0, step=1, limit=18
  $region2: #{transformer_forward.7} parent=0 // loop_pre_header
    _
  $region3: #{transformer_forward.7} parent=0 // loop_header
    %s11 = sphi 0, %s15
    %p12 = scmp.ge.s32.totalorder %s11, 18
    %s18 = sphi 0, %s37
    %s19 = sphi 0, %s33
    %s20 = sphi 0, %s29
    %s21 = sphi 0, %s18
    %s22 = sphi 0, %s19
    %s23 = sphi 0, %s20
    %s24 = sphi 0, %s21
    %s25 = sphi 0, %s22
    %s26 = sphi 0, %s23
    %s42 = sphi 0, %s44
    %s45 = sphi 0, %s42
    %s46 = sphi 0, %s45
    %s62 = sphi 0, %s46
    %s66 = sphi 0, %s66
    %s68 = sphi 0, %s66
    %s69 = sphi 0, %s68
    %s83 = sphi 0, %s69
    %s87 = sphi 0, %s87
    %s89 = sphi 0, %s87
    %s90 = sphi 0, %s89
    %s104 = sphi 0, %s90
    %s110 = sphi 0, %s112
    %s113 = sphi 0, %s110
    %s114 = sphi 0, %s113
    %s130 = sphi 0, %s114
    %s136 = sphi 0, %s138
    %s139 = sphi 0, %s136
    %s140 = sphi 0, %s139
    %s156 = sphi 0, %s140
    %s166 = sphi 0, %s168
    %s169 = sphi 0, %s166
    %s170 = sphi 0, %s169
    %s186 = sphi 0, %s170
  $region4: #{transformer_forward.7} parent=0 // loop_header_branch
    %14 = sbr.rel (%p12) target = $region8
  $region5: #{transformer_forward.7} parent=0 // loop_body
    %s16 = ssub.s32 %s11, 1
    %s17 = ssub.s32 %s11, 2
    %s27 = sadd.s32 1, %s20
    %p28 = scmp.ge.s32.totalorder %s27, 8
    %s29 = scalar_select %p28, 0, %s27
    %s30 = sadd.s32 1, %s19
    %s31 = scalar_select %p28, %s30, %s19
    %p32 = scmp.ge.s32.totalorder %s31, 1
    %s33 = scalar_select %p32, 0, %s31
    %s34 = sadd.s32 1, %s18
    %s35 = scalar_select %p32, %s34, %s18
    %p36 = scmp.ge.s32.totalorder %s35, 2
    %s37 = scalar_select %p36, 0, %s35
    %s38 = ssub.s32 %s18, %s37
    %s39 = ssub.s32 %s19, %s33
    %s40 = sor.u32 %s38, %s39
    %p41 = scmp.eq.s32.totalorder %s40, 0
    %s43 = sadd.s32 %s42, 1
    %s44 = scalar_select %p41, %s42, %s43
    %p47 = pneg %p41
    %p48 = scmp.eq.s32.totalorder %s11, 15
    %p49 = por %p47, %p48
    %p50 = scmp.ne.s32.totalorder %s42, %s45
    %p51 = scmp.eq.s32.totalorder %s11, 0
    %p52 = por %p50, %p51
    %p53 = scmp.ne.s32.totalorder %s42, %s45
    %p54 = scmp.eq.s32.totalorder %s16, 15
    %p55 = por %p53, %p54
    %p56 = scmp.ne.s32.totalorder %s45, %s46
    %p57 = scmp.eq.s32.totalorder %s16, 0
    %p58 = por %p56, %p57
    %p59 = scmp.ne.s32.totalorder %s45, %s46
    %p60 = scmp.eq.s32.totalorder %s17, 15
    %p61 = por %p59, %p60
    %p63 = scmp.ne.s32.totalorder %s46, %s62
    %p64 = scmp.eq.s32.totalorder %s17, 0
    %p65 = por %p63, %p64
    %s67 = sadd.s32 %s66, 1
    %p70 = scmp.eq.s32.totalorder %s11, 15
    %p71 = scmp.ne.s32.totalorder %s66, %s68
    %p72 = scmp.eq.s32.totalorder %s11, 0
    %p73 = por %p71, %p72
    %p74 = scmp.ne.s32.totalorder %s66, %s68
    %p75 = scmp.eq.s32.totalorder %s16, 15
    %p76 = por %p74, %p75
    %p77 = scmp.ne.s32.totalorder %s68, %s69
    %p78 = scmp.eq.s32.totalorder %s16, 0
    %p79 = por %p77, %p78
    %p80 = scmp.ne.s32.totalorder %s68, %s69
    %p81 = scmp.eq.s32.totalorder %s17, 15
    %p82 = por %p80, %p81
    %p84 = scmp.ne.s32.totalorder %s69, %s83
    %p85 = scmp.eq.s32.totalorder %s17, 0
    %p86 = por %p84, %p85
    %s88 = sadd.s32 %s87, 1
    %p91 = scmp.eq.s32.totalorder %s11, 15
    %p92 = scmp.ne.s32.totalorder %s87, %s89
    %p93 = scmp.eq.s32.totalorder %s11, 0
    %p94 = por %p92, %p93
    %p95 = scmp.ne.s32.totalorder %s87, %s89
    %p96 = scmp.eq.s32.totalorder %s16, 15
    %p97 = por %p95, %p96
    %p98 = scmp.ne.s32.totalorder %s89, %s90
    %p99 = scmp.eq.s32.totalorder %s16, 0
    %p100 = por %p98, %p99
    %p101 = scmp.ne.s32.totalorder %s89, %s90
    %p102 = scmp.eq.s32.totalorder %s17, 15
    %p103 = por %p101, %p102
    %p105 = scmp.ne.s32.totalorder %s90, %s104
    %p106 = scmp.eq.s32.totalorder %s17, 0
    %p107 = por %p105, %p106
    %s108 = ssub.s32 %s20, %s29
    %p109 = scmp.eq.s32.totalorder %s108, 0
    %s111 = sadd.s32 %s110, 1
    %s112 = scalar_select %p109, %s110, %s111
    %p115 = pneg %p109
    %p116 = scmp.eq.s32.totalorder %s11, 15
    %p117 = por %p115, %p116
    %p118 = scmp.ne.s32.totalorder %s110, %s113
    %p119 = scmp.eq.s32.totalorder %s11, 0
    %p120 = por %p118, %p119
    %p121 = scmp.ne.s32.totalorder %s110, %s113
    %p122 = scmp.eq.s32.totalorder %s16, 15
    %p123 = por %p121, %p122
    %p124 = scmp.ne.s32.totalorder %s113, %s114
    %p125 = scmp.eq.s32.totalorder %s16, 0
    %p126 = por %p124, %p125
    %p127 = scmp.ne.s32.totalorder %s113, %s114
    %p128 = scmp.eq.s32.totalorder %s17, 15
    %p129 = por %p127, %p128
    %p131 = scmp.ne.s32.totalorder %s114, %s130
    %p132 = scmp.eq.s32.totalorder %s17, 0
    %p133 = por %p131, %p132
    %s134 = ssub.s32 %s20, %s29
    %p135 = scmp.eq.s32.totalorder %s134, 0
    %s137 = sadd.s32 %s136, 1
    %s138 = scalar_select %p135, %s136, %s137
    %p141 = pneg %p135
    %p142 = scmp.eq.s32.totalorder %s11, 15
    %p143 = por %p141, %p142
    %p144 = scmp.ne.s32.totalorder %s136, %s139
    %p145 = scmp.eq.s32.totalorder %s11, 0
    %p146 = por %p144, %p145
    %p147 = scmp.ne.s32.totalorder %s136, %s139
    %p148 = scmp.eq.s32.totalorder %s16, 15
    %p149 = por %p147, %p148
    %p150 = scmp.ne.s32.totalorder %s139, %s140
    %p151 = scmp.eq.s32.totalorder %s16, 0
    %p152 = por %p150, %p151
    %p153 = scmp.ne.s32.totalorder %s139, %s140
    %p154 = scmp.eq.s32.totalorder %s17, 15
    %p155 = por %p153, %p154
    %p157 = scmp.ne.s32.totalorder %s140, %s156
    %p158 = scmp.eq.s32.totalorder %s17, 0
    %p159 = por %p157, %p158
    %s160 = ssub.s32 %s18, %s37
    %s161 = ssub.s32 %s20, %s29
    %s162 = sor.u32 %s160, %s161
    %s163 = ssub.s32 %s19, %s33
    %s164 = sor.u32 %s162, %s163
    %p165 = scmp.eq.s32.totalorder %s164, 0
    %s167 = sadd.s32 %s166, 1
    %s168 = scalar_select %p165, %s166, %s167
    %p171 = pneg %p165
    %p172 = scmp.eq.s32.totalorder %s11, 15
    %p173 = por %p171, %p172
    %p174 = scmp.ne.s32.totalorder %s166, %s169
    %p175 = scmp.eq.s32.totalorder %s11, 0
    %p176 = por %p174, %p175
    %p177 = scmp.ne.s32.totalorder %s166, %s169
    %p178 = scmp.eq.s32.totalorder %s16, 15
    %p179 = por %p177, %p178
    %p180 = scmp.ne.s32.totalorder %s169, %s170
    %p181 = scmp.eq.s32.totalorder %s16, 0
    %p182 = por %p180, %p181
    %p183 = scmp.ne.s32.totalorder %s169, %s170
    %p184 = scmp.eq.s32.totalorder %s17, 15
    %p185 = por %p183, %p184
    %p187 = scmp.ne.s32.totalorder %s170, %s186
    %p188 = scmp.eq.s32.totalorder %s17, 0
    %p189 = por %p187, %p188
    %p190 = scmp.le.s32.totalorder 1, %s11
    %p191 = scmp.lt.s32.totalorder %s11, 17
    %p192 = pnand %p190, %p191
    %p193 = pneg %p192
    // Predicated region
    $region9: #{transformer_forward.7} parent=5 // pred_check
      _
    $region10: #{transformer_forward.7} parent=5 // pred_check_branch
      %195 = sbr.rel (%p192) target = $region12
    $region11: #{transformer_forward.7} parent=5 // pred_region
      %s196 = ssub.s32 %s11, 1
      // Predicated region
      $region13: #{transformer_forward.7} parent=11 // pred_check
        %p197 = pneg %p79
      $region14: #{transformer_forward.7} parent=11 // pred_check_branch
        %199 = sbr.rel (%p197) target = $region16
      $region15: #{transformer_forward.7} parent=11 // pred_region
        _
      $region16: #{transformer_forward.7} parent=11 // pred_fallthru
        _
      // Predicated region
      $region17: #{transformer_forward.7} parent=11 // pred_check
        %p200 = pneg %p100
      $region18: #{transformer_forward.7} parent=11 // pred_check_branch
        %202 = sbr.rel (%p200) target = $region20
      $region19: #{transformer_forward.7} parent=11 // pred_region
        _
      $region20: #{transformer_forward.7} parent=11 // pred_fallthru
        _
    $region12: #{transformer_forward.7} parent=5 // pred_fallthru
      _
    %p203 = scmp.lt.s32.totalorder %s11, 16
    // Predicated region
    $region21: #{transformer_forward.7} parent=5 // pred_check
      %p204 = pneg %p203
    $region22: #{transformer_forward.7} parent=5 // pred_check_branch
      %206 = sbr.rel (%p204) target = $region24
    $region23: #{transformer_forward.7} parent=5 // pred_region
      // Predicated region
      $region25: #{transformer_forward.7} parent=23 // pred_check
        %p207 = pneg %p52
      $region26: #{transformer_forward.7} parent=23 // pred_check_branch
        %209 = sbr.rel (%p207) target = $region28
      $region27: #{transformer_forward.7} parent=23 // pred_region
        %s210 = smul.u32 2, %s19
        %p211 = scmp.lt.s32.totalorder %s18, 1
        %s212 = scalar_select %p211, %s18, 1
        %p213 = scmp.lt.s32.totalorder %s210, 1
        %s214 = scalar_select %p213, %s210, 1
        %s215 = smul.addr %s212, 2
        %s216 = sadd.s32 %s214, %s215
        %s217 = smul.addr %s216, 8
        %s218 = scalar_lea.vmem %s0, %s217
        %s219 = smul.u32 2, %s19
      $region28: #{transformer_forward.7} parent=23 // pred_fallthru
        _
      // Predicated region
      $region29: #{transformer_forward.7} parent=23 // pred_check
        %p220 = pneg %p120
      $region30: #{transformer_forward.7} parent=23 // pred_check_branch
        %222 = sbr.rel (%p220) target = $region32
      $region31: #{transformer_forward.7} parent=23 // pred_region
        %p223 = scmp.lt.s32.totalorder %s20, 7
        %s224 = scalar_select %p223, %s20, 7
        %s225 = smul.addr %s224, 4
        %s226 = smul.addr %s225, 4
        %s227 = scalar_lea.vmem %s3, %s226
      $region32: #{transformer_forward.7} parent=23 // pred_fallthru
        _
      // Predicated region
      $region33: #{transformer_forward.7} parent=23 // pred_check
        %p228 = pneg %p146
      $region34: #{transformer_forward.7} parent=23 // pred_check_branch
        %230 = sbr.rel (%p228) target = $region36
      $region35: #{transformer_forward.7} parent=23 // pred_region
        %p231 = scmp.lt.s32.totalorder %s20, 7
        %s232 = scalar_select %p231, %s20, 7
        %s233 = scalar_lea.vmem %s4, %s232
      $region36: #{transformer_forward.7} parent=23 // pred_fallthru
        _
    $region24: #{transformer_forward.7} parent=5 // pred_fallthru
      _
    %p234 = scmp.le.s32.totalorder 1, %s11
    %p235 = scmp.lt.s32.totalorder %s11, 17
    %p236 = pnand %p234, %p235
    %p237 = pneg %p236
    // Predicated region
    $region37: #{transformer_forward.7} parent=5 // pred_check
      _
    $region38: #{transformer_forward.7} parent=5 // pred_check_branch
      %239 = sbr.rel (%p236) target = $region40
    $region39: #{transformer_forward.7} parent=5 // pred_region
      %s240 = ssub.s32 %s11, 1
      %s241 = smul.u32 2, %s22
      %p242 = scmp.lt.s32.totalorder %s21, 1
      %s243 = scalar_select %p242, %s21, 1
      %p244 = scmp.lt.s32.totalorder %s241, 1
      %s245 = scalar_select %p244, %s241, 1
      %s246 = smul.addr %s243, 2
      %s247 = sadd.s32 %s245, %s246
      %s248 = smul.addr %s247, 8
      %s249 = scalar_lea.vmem %s0, %s248
      %p250 = pneg %p58
      %p251 = pneg %p55
      %p252 = pneg %p79
      %p253 = pneg %p76
      %p254 = pneg %p100
      %p255 = pneg %p97
      %p256 = scmp.lt.s32.totalorder %s23, 7
      %s257 = scalar_select %p256, %s23, 7
      %s258 = smul.addr %s257, 4
      %s259 = smul.addr %s258, 4
      %s260 = scalar_lea.vmem %s3, %s259
      %p261 = pneg %p126
      %p262 = pneg %p123
      %p263 = scmp.lt.s32.totalorder %s23, 7
      %s264 = scalar_select %p263, %s23, 7
      %s265 = scalar_lea.vmem %s4, %s264
      %p266 = pneg %p152
      %p267 = pneg %p149
      %p268 = pneg %p182
      %p269 = pneg %p179
      %s270 = smul.u32 2, %s22
      %p271 = scmp.lt.s32.totalorder %s21, 1
      %s272 = scalar_select %p271, %s21, 1
      %p273 = scmp.lt.s32.totalorder %s23, 7
      %s274 = scalar_select %p273, %s23, 7
      %p275 = scmp.lt.s32.totalorder %s270, 1
      %s276 = scalar_select %p275, %s270, 1
      %s277 = smul.addr %s274, 2
      %s278 = sadd.s32 %s276, %s277
      %s279 = smul.addr %s272, 16
      %s280 = sadd.s32 %s278, %s279
      %s281 = smul.addr %s280, 4
      %s282 = scalar_lea.vmem %s5, %s281
      %s283 = smul.u32 2, %s22
      %p284 = scmp.lt.s32.totalorder %s21, 1
      %s285 = scalar_select %p284, %s21, 1
      %p286 = scmp.lt.s32.totalorder %s283, 1
      %s287 = scalar_select %p286, %s283, 1
      %s288 = smul.addr %s285, 2
      %s289 = sadd.s32 %s287, %s288
      %s290 = smul.addr %s289, 8
      %s291 = scalar_lea.vmem %s0, %s290
      %s292 = smul.u32 2, %s22
      %p293 = scmp.lt.s32.totalorder %s23, 7
      %s294 = scalar_select %p293, %s23, 7
      %s295 = smul.addr %s294, 4
      %s296 = smul.addr %s295, 4
      %s297 = scalar_lea.vmem %s3, %s296
      %p298 = scmp.lt.s32.totalorder %s23, 7
      %s299 = scalar_select %p298, %s23, 7
      %s300 = scalar_lea.vmem %s4, %s299
      %s301 = smul.u32 2, %s22
      %p302 = scmp.lt.s32.totalorder %s21, 1
      %s303 = scalar_select %p302, %s21, 1
      %p304 = scmp.lt.s32.totalorder %s23, 7
      %s305 = scalar_select %p304, %s23, 7
      %p306 = scmp.lt.s32.totalorder %s301, 1
      %s307 = scalar_select %p306, %s301, 1
      %s308 = smul.addr %s305, 2
      %s309 = sadd.s32 %s307, %s308
      %s310 = smul.addr %s303, 16
      %s311 = sadd.s32 %s309, %s310
      %s312 = smul.addr %s311, 4
      %s313 = scalar_lea.vmem %s5, %s312
      %s314 = smul.u32 2, %s22
      %v316 = vld [vmem:[%s291] sm:$0xff]
      %v317 = vld [vmem:[%s291 + $0x8] sm:$0xff]
      %vm318 = vcmask 261120
      %v319 = vsel %vm318, %v316, 0.0
      %320 = vadd.xlane.f32.xlu0 %v319
      %v321 = vpop.xlane.xlu0 %320
      %v322 = vsel %vm318, %v317, 0.0
      %323 = vadd.xlane.f32.xlu0 %v322
      %v324 = vpop.xlane.xlu0 %323
      %v325 = vrcp.pop 32.0
      %v326 = vmul.f32 %v321, %v325
      %v327 = vmul.f32 %v324, %v325
      %v328 = vsub.f32 %v316, %v326
      %v329 = vsub.f32 %v317, %v327
      %v330 = vmul.f32 %v328, %v328
      %v331 = vmul.f32 %v329, %v329
      %v332 = vsel %vm318, %v330, 0.0
      %333 = vadd.xlane.f32.xlu0 %v332
      %v334 = vpop.xlane.xlu0 %333
      %v335 = vsel %vm318, %v331, 0.0
      %336 = vadd.xlane.f32.xlu0 %v335
      %v337 = vpop.xlane.xlu0 %336
      %v338 = vmul.f32 %v334, %v325
      %v339 = vmul.f32 %v337, %v325
      %v340 = vadd.f32 %v338, 1e-05
      %v341 = vadd.f32 %v339, 1e-05
      %v342 = vrsqrt.pop %v340
      %v343 = vrsqrt.pop %v341
      %v344 = vmul.f32 %v328, %v342
      %v345 = vmul.f32 %v329, %v343
      %v346 = vld [vmem:[%s1] sm:$0x1]
      %v348 = vlaneseq
      %v349 = vshrl.u32 %v348, 7
      %v350 = vsub.s32 0, %v349
      %v351 = vrot.slane %v346, %v350
      %v353 = vmul.f32 %v344, %v351
      %v354 = vmul.f32 %v345, %v351
      %v355 = vld [vmem:[%s2] sm:$0x1]
      %v357 = vlaneseq
      %v358 = vshrl.u32 %v357, 7
      %v359 = vsub.s32 0, %v358
      %v360 = vrot.slane %v355, %v359
      %v362 = vadd.f32 %v353, %v360
      %v363 = vadd.f32 %v354, %v360
      %v364 = vpack.c.bf16 %v363, %v362
      %v365 = vld [vmem:[%s297] sm:$0xf]
      %v366 = vld [vmem:[%s297 + $0x4] sm:$0xf]
      %v367 = vld [vmem:[%s297 + $0x8] sm:$0xf]
      %v368 = vld [vmem:[%s297 + $0xc] sm:$0xf]
      %v369 = vld [vmem:[%s300] sm:$0x1]
      %v371 = vlaneseq
      %v372 = vshrl.u32 %v371, 7
      %v373 = vsub.s32 0, %v372
      %v374 = vrot.slane %v369, %v373
      %v380 = vunpack.c.l.b16 %v365
      %v381 = vunpack.c.l.b16 %v366
      %v382 = vunpack.c.l.b16 %v367
      %v383 = vunpack.c.l.b16 %v368
      %v384 = vpack.c.b16 %v381, %v380
      %v385 = vpack.c.b16 %v383, %v382
      %v389 = vsel %vm318, %v364, 0
      %391 = vmatprep.subr.bf16.mxu0 0
      %392 = vmatpush1.bf16.msra.mxu0 0
      %393 = vmatprep.subr.bf16.mxu0 0
      %394 = vmatpush1.bf16.msra.mxu0 0
      %395 = vmatprep.subr.bf16.mxu0 0
      %396 = vmatpush1.bf16.msra.mxu0 0
      %397 = vmatprep.subr.bf16.mxu0 0
      %398 = vmatpush1.bf16.msra.mxu0 0
      %399 = vmatprep.subr.bf16.mxu0 0
      %400 = vmatpush1.bf16.msra.mxu0 0
      %401 = vmatprep.subr.bf16.mxu0 0
      %402 = vmatpush1.bf16.msra.mxu0 0
      %403 = vmatprep.subr.bf16.mxu0 0
      %404 = vmatpush1.bf16.msra.mxu0 %v385
      %405 = vmatprep.subr.bf16.mxu0 0
      %406 = vmatpush1.bf16.msra.mxu0 %v384
      %407 = vmatprep.subr.bf16.mxu0 0
      %408 = vmatpush2.bf16.msra.mxu0 0
      %409 = vmatprep.subr.bf16.mxu0 0
      %410 = vmatpush2.bf16.msra.mxu0 0
      %411 = vmatprep.subr.bf16.mxu0 0
      %412 = vmatpush2.bf16.msra.mxu0 0
      %413 = vmatprep.subr.bf16.mxu0 0
      %414 = vmatpush2.bf16.msra.mxu0 0
      %415 = vmatprep.subr.bf16.mxu0 0
      %416 = vmatpush2.bf16.msra.mxu0 0
      %417 = vmatprep.subr.bf16.mxu0 0
      %418 = vmatpush2.bf16.msra.mxu0 0
      %419 = vmatprep.subr.bf16.mxu0 0
      %420 = vmatpush2.bf16.msra.mxu0 0
      %421 = vmatprep.subr.bf16.mxu0 0
      %422 = vmatpush2.bf16.msra.mxu0 0
      %423 = vmatprep.mubr.bf16.mxu0 0
      %424 = vmatmul.mubr.bf16.gmra.mxu0 %v389
      %v425 = vpop.f32.mrf.mxu0
      %v426 = vadd.f32 %v374, %v425
      %v427 = vpop.f32.mrf.mxu0
      %v428 = vpop.f32.mrf.mxu0
      %v429 = vadd.f32 %v374, %v428
      %v430 = vpop.f32.mrf.mxu0
      %431 = vdwg.mxu0
      %v432 = vpack.c.bf16 %v429, %v426
      %v434 = vunpack.c.l.b16 %v432
      %v435 = vunpack.c.h.b16 %v432
      %v436 = vpack.c.b16 %v434, %v434
      %v437 = vpack.c.b16 %v435, %v435
      %vm440 = vcmask 93184
      %441 = vst.msk [vmem:[%s313] sm:$0xf] %vm440, %v436
      %442 = vst.msk [vmem:[%s313 + $0x4] sm:$0xf] %vm440, %v437
      %s443 = smul.u32 2, %s22
      %p444 = scmp.lt.s32.totalorder %s21, 1
      %s445 = scalar_select %p444, %s21, 1
      %p446 = scmp.lt.s32.totalorder %s23, 7
      %s447 = scalar_select %p446, %s23, 7
      %p448 = scmp.lt.s32.totalorder %s443, 1
      %s449 = scalar_select %p448, %s443, 1
      %s450 = smul.addr %s447, 2
      %s451 = sadd.s32 %s449, %s450
      %s452 = smul.addr %s445, 16
      %s453 = sadd.s32 %s451, %s452
      %s454 = smul.addr %s453, 4
      %s455 = scalar_lea.vmem %s5, %s454
      // Predicated region
      $region41: #{transformer_forward.7} parent=39 // pred_check
        %p456 = pneg %p179
      $region42: #{transformer_forward.7} parent=39 // pred_check_branch
        %458 = sbr.rel (%p456) target = $region44
      $region43: #{transformer_forward.7} parent=39 // pred_region
        %s459 = smul.u32 2, %s22
      $region44: #{transformer_forward.7} parent=39 // pred_fallthru
        _
    $region40: #{transformer_forward.7} parent=5 // pred_fallthru
      _
    %p460 = scmp.le.s32.totalorder 2, %s11
    // Predicated region
    $region45: #{transformer_forward.7} parent=5 // pred_check
      %p461 = pneg %p460
    $region46: #{transformer_forward.7} parent=5 // pred_check_branch
      %463 = sbr.rel (%p461) target = $region48
    $region47: #{transformer_forward.7} parent=5 // pred_region
      %s464 = ssub.s32 %s11, 2
      // Predicated region
      $region49: #{transformer_forward.7} parent=47 // pred_check
        %p465 = pneg %p185
      $region50: #{transformer_forward.7} parent=47 // pred_check_branch
        %467 = sbr.rel (%p465) target = $region52
      $region51: #{transformer_forward.7} parent=47 // pred_region
        %s468 = smul.u32 2, %s25
        %p469 = scmp.lt.s32.totalorder %s24, 1
        %s470 = scalar_select %p469, %s24, 1
        %p471 = scmp.lt.s32.totalorder %s26, 7
        %s472 = scalar_select %p471, %s26, 7
        %p473 = scmp.lt.s32.totalorder %s468, 1
        %s474 = scalar_select %p473, %s468, 1
        %s475 = smul.addr %s472, 2
        %s476 = sadd.s32 %s474, %s475
        %s477 = smul.addr %s470, 16
        %s478 = sadd.s32 %s476, %s477
        %s479 = smul.addr %s478, 4
        %s480 = scalar_lea.vmem %s5, %s479
      $region52: #{transformer_forward.7} parent=47 // pred_fallthru
        _
    $region48: #{transformer_forward.7} parent=5 // pred_fallthru
      _
  $region6: #{transformer_forward.7} parent=0 // loop_footer
    %s15 = sadd.s32 1, %s11
  $region7: #{transformer_forward.7} parent=0 // loop_footer_branch
    %10 = sbr.rel target = $region3
  $region8: #{transformer_forward.7} parent=0 // loop_exit
    _

// kernel: transformer_forward.8
$region0: #{transformer_forward.8}
  #allocation0 [shape = 'u32[]', space=smem, size = 0x4, offset = 0x4, fixed_abs, tag = 'smem constant byte address 0x4 - core index']
  #allocation1 [shape = 'u32[144,128]{1,0:T(1,128)}', space=vmem, size = 0x12000, scoped, tag = 'internal scratch']
  %s0 = inlined_call_operand.vmem [shape: f32[2,16,32], index: 0, kind: input, shape index: {}]
  %s1 = inlined_call_operand.vmem [shape: bf16[2,8,16,12], index: 1, kind: input, shape index: {}]
  %s2 = inlined_call_operand.vmem [shape: f32[2,1,16], index: 2, kind: input, shape index: {}]
  %s3 = inlined_call_operand.vmem [shape: bf16[8,4,32], index: 3, kind: input, shape index: {}]
  %s4 = inlined_call_operand.vmem [shape: f32[1,32], index: 4, kind: input, shape index: {}]
  %s5 = inlined_call_operand.vmem [shape: f32[2,16,32], index: 5, kind: output, shape index: {}]
  %s6 = sld [smem:[#allocation0]]
  $region57: #{transformer_forward.8} parent=0
    _
  %s8 = ssub.s32 1, %s6
  %s9 = scalar_select 0, %s8, %s6
  loop: start=0, step=1, limit=18
  $region2: #{transformer_forward.8} parent=0 // loop_pre_header
    _
  $region3: #{transformer_forward.8} parent=0 // loop_header
    %s11 = sphi 0, %s15
    %p12 = scmp.ge.s32.totalorder %s11, 18
    %s18 = sphi 0, %s30
    %s19 = sphi 0, %s26
    %s20 = sphi 0, %s18
    %s21 = sphi 0, %s19
    %s22 = sphi 0, %s20
    %s23 = sphi 0, %s21
    %s33 = sphi 0, %s35
    %s36 = sphi 0, %s33
    %s37 = sphi 0, %s36
    %s53 = sphi 0, %s37
    %s61 = sphi 0, %s63
    %s64 = sphi 0, %s61
    %s65 = sphi 0, %s64
    %s81 = sphi 0, %s65
    %s87 = sphi 0, %s89
    %s90 = sphi 0, %s87
    %s91 = sphi 0, %s90
    %s107 = sphi 0, %s91
    %s113 = sphi 0, %s115
    %s116 = sphi 0, %s113
    %s117 = sphi 0, %s116
    %s133 = sphi 0, %s117
    %s137 = sphi 0, %s137
    %s139 = sphi 0, %s137
    %s140 = sphi 0, %s139
    %s154 = sphi 0, %s140
    %s160 = sphi 0, %s162
    %s163 = sphi 0, %s160
    %s164 = sphi 0, %s163
    %s180 = sphi 0, %s164
  $region4: #{transformer_forward.8} parent=0 // loop_header_branch
    %14 = sbr.rel (%p12) target = $region8
  $region5: #{transformer_forward.8} parent=0 // loop_body
    %s16 = ssub.s32 %s11, 1
    %s17 = ssub.s32 %s11, 2
    %s24 = sadd.s32 1, %s19
    %p25 = scmp.ge.s32.totalorder %s24, 8
    %s26 = scalar_select %p25, 0, %s24
    %s27 = sadd.s32 1, %s18
    %s28 = scalar_select %p25, %s27, %s18
    %p29 = scmp.ge.s32.totalorder %s28, 2
    %s30 = scalar_select %p29, 0, %s28
    %s31 = ssub.s32 %s18, %s30
    %p32 = scmp.eq.s32.totalorder %s31, 0
    %s34 = sadd.s32 %s33, 1
    %s35 = scalar_select %p32, %s33, %s34
    %p38 = pneg %p32
    %p39 = scmp.eq.s32.totalorder %s11, 15
    %p40 = por %p38, %p39
    %p41 = scmp.ne.s32.totalorder %s33, %s36
    %p42 = scmp.eq.s32.totalorder %s11, 0
    %p43 = por %p41, %p42
    %p44 = scmp.ne.s32.totalorder %s33, %s36
    %p45 = scmp.eq.s32.totalorder %s16, 15
    %p46 = por %p44, %p45
    %p47 = scmp.ne.s32.totalorder %s36, %s37
    %p48 = scmp.eq.s32.totalorder %s16, 0
    %p49 = por %p47, %p48
    %p50 = scmp.ne.s32.totalorder %s36, %s37
    %p51 = scmp.eq.s32.totalorder %s17, 15
    %p52 = por %p50, %p51
    %p54 = scmp.ne.s32.totalorder %s37, %s53
    %p55 = scmp.eq.s32.totalorder %s17, 0
    %p56 = por %p54, %p55
    %s57 = ssub.s32 %s18, %s30
    %s58 = ssub.s32 %s19, %s26
    %s59 = sor.u32 %s57, %s58
    %p60 = scmp.eq.s32.totalorder %s59, 0
    %s62 = sadd.s32 %s61, 1
    %s63 = scalar_select %p60, %s61, %s62
    %p66 = pneg %p60
    %p67 = scmp.eq.s32.totalorder %s11, 15
    %p68 = por %p66, %p67
    %p69 = scmp.ne.s32.totalorder %s61, %s64
    %p70 = scmp.eq.s32.totalorder %s11, 0
    %p71 = por %p69, %p70
    %p72 = scmp.ne.s32.totalorder %s61, %s64
    %p73 = scmp.eq.s32.totalorder %s16, 15
    %p74 = por %p72, %p73
    %p75 = scmp.ne.s32.totalorder %s64, %s65
    %p76 = scmp.eq.s32.totalorder %s16, 0
    %p77 = por %p75, %p76
    %p78 = scmp.ne.s32.totalorder %s64, %s65
    %p79 = scmp.eq.s32.totalorder %s17, 15
    %p80 = por %p78, %p79
    %p82 = scmp.ne.s32.totalorder %s65, %s81
    %p83 = scmp.eq.s32.totalorder %s17, 0
    %p84 = por %p82, %p83
    %s85 = ssub.s32 %s18, %s30
    %p86 = scmp.eq.s32.totalorder %s85, 0
    %s88 = sadd.s32 %s87, 1
    %s89 = scalar_select %p86, %s87, %s88
    %p92 = pneg %p86
    %p93 = scmp.eq.s32.totalorder %s11, 15
    %p94 = por %p92, %p93
    %p95 = scmp.ne.s32.totalorder %s87, %s90
    %p96 = scmp.eq.s32.totalorder %s11, 0
    %p97 = por %p95, %p96
    %p98 = scmp.ne.s32.totalorder %s87, %s90
    %p99 = scmp.eq.s32.totalorder %s16, 15
    %p100 = por %p98, %p99
    %p101 = scmp.ne.s32.totalorder %s90, %s91
    %p102 = scmp.eq.s32.totalorder %s16, 0
    %p103 = por %p101, %p102
    %p104 = scmp.ne.s32.totalorder %s90, %s91
    %p105 = scmp.eq.s32.totalorder %s17, 15
    %p106 = por %p104, %p105
    %p108 = scmp.ne.s32.totalorder %s91, %s107
    %p109 = scmp.eq.s32.totalorder %s17, 0
    %p110 = por %p108, %p109
    %s111 = ssub.s32 %s19, %s26
    %p112 = scmp.eq.s32.totalorder %s111, 0
    %s114 = sadd.s32 %s113, 1
    %s115 = scalar_select %p112, %s113, %s114
    %p118 = pneg %p112
    %p119 = scmp.eq.s32.totalorder %s11, 15
    %p120 = por %p118, %p119
    %p121 = scmp.ne.s32.totalorder %s113, %s116
    %p122 = scmp.eq.s32.totalorder %s11, 0
    %p123 = por %p121, %p122
    %p124 = scmp.ne.s32.totalorder %s113, %s116
    %p125 = scmp.eq.s32.totalorder %s16, 15
    %p126 = por %p124, %p125
    %p127 = scmp.ne.s32.totalorder %s116, %s117
    %p128 = scmp.eq.s32.totalorder %s16, 0
    %p129 = por %p127, %p128
    %p130 = scmp.ne.s32.totalorder %s116, %s117
    %p131 = scmp.eq.s32.totalorder %s17, 15
    %p132 = por %p130, %p131
    %p134 = scmp.ne.s32.totalorder %s117, %s133
    %p135 = scmp.eq.s32.totalorder %s17, 0
    %p136 = por %p134, %p135
    %s138 = sadd.s32 %s137, 1
    %p141 = scmp.eq.s32.totalorder %s11, 15
    %p142 = scmp.ne.s32.totalorder %s137, %s139
    %p143 = scmp.eq.s32.totalorder %s11, 0
    %p144 = por %p142, %p143
    %p145 = scmp.ne.s32.totalorder %s137, %s139
    %p146 = scmp.eq.s32.totalorder %s16, 15
    %p147 = por %p145, %p146
    %p148 = scmp.ne.s32.totalorder %s139, %s140
    %p149 = scmp.eq.s32.totalorder %s16, 0
    %p150 = por %p148, %p149
    %p151 = scmp.ne.s32.totalorder %s139, %s140
    %p152 = scmp.eq.s32.totalorder %s17, 15
    %p153 = por %p151, %p152
    %p155 = scmp.ne.s32.totalorder %s140, %s154
    %p156 = scmp.eq.s32.totalorder %s17, 0
    %p157 = por %p155, %p156
    %s158 = ssub.s32 %s18, %s30
    %p159 = scmp.eq.s32.totalorder %s158, 0
    %s161 = sadd.s32 %s160, 1
    %s162 = scalar_select %p159, %s160, %s161
    %p165 = pneg %p159
    %p166 = scmp.eq.s32.totalorder %s11, 15
    %p167 = por %p165, %p166
    %p168 = scmp.ne.s32.totalorder %s160, %s163
    %p169 = scmp.eq.s32.totalorder %s11, 0
    %p170 = por %p168, %p169
    %p171 = scmp.ne.s32.totalorder %s160, %s163
    %p172 = scmp.eq.s32.totalorder %s16, 15
    %p173 = por %p171, %p172
    %p174 = scmp.ne.s32.totalorder %s163, %s164
    %p175 = scmp.eq.s32.totalorder %s16, 0
    %p176 = por %p174, %p175
    %p177 = scmp.ne.s32.totalorder %s163, %s164
    %p178 = scmp.eq.s32.totalorder %s17, 15
    %p179 = por %p177, %p178
    %p181 = scmp.ne.s32.totalorder %s164, %s180
    %p182 = scmp.eq.s32.totalorder %s17, 0
    %p183 = por %p181, %p182
    %p184 = scmp.le.s32.totalorder 1, %s11
    %p185 = scmp.lt.s32.totalorder %s11, 17
    %p186 = pnand %p184, %p185
    %p187 = pneg %p186
    // Predicated region
    $region9: #{transformer_forward.8} parent=5 // pred_check
      _
    $region10: #{transformer_forward.8} parent=5 // pred_check_branch
      %189 = sbr.rel (%p186) target = $region12
    $region11: #{transformer_forward.8} parent=5 // pred_region
      %s190 = ssub.s32 %s11, 1
      // Predicated region
      $region13: #{transformer_forward.8} parent=11 // pred_check
        %p191 = pneg %p150
      $region14: #{transformer_forward.8} parent=11 // pred_check_branch
        %193 = sbr.rel (%p191) target = $region16
      $region15: #{transformer_forward.8} parent=11 // pred_region
        _
      $region16: #{transformer_forward.8} parent=11 // pred_fallthru
        _
    $region12: #{transformer_forward.8} parent=5 // pred_fallthru
      _
    %p194 = scmp.lt.s32.totalorder %s11, 16
    // Predicated region
    $region17: #{transformer_forward.8} parent=5 // pred_check
      %p195 = pneg %p194
    $region18: #{transformer_forward.8} parent=5 // pred_check_branch
      %197 = sbr.rel (%p195) target = $region20
    $region19: #{transformer_forward.8} parent=5 // pred_region
      // Predicated region
      $region21: #{transformer_forward.8} parent=19 // pred_check
        %p198 = pneg %p43
      $region22: #{transformer_forward.8} parent=19 // pred_check_branch
        %200 = sbr.rel (%p198) target = $region24
      $region23: #{transformer_forward.8} parent=19 // pred_region
        %p201 = scmp.lt.s32.totalorder %s18, 1
        %s202 = scalar_select %p201, %s18, 1
        %s203 = smul.addr %s202, 2
        %s204 = smul.addr %s203, 8
        %s205 = scalar_lea.vmem %s0, %s204
      $region24: #{transformer_forward.8} parent=19 // pred_fallthru
        _
      // Predicated region
      $region25: #{transformer_forward.8} parent=19 // pred_check
        %p206 = pneg %p71
      $region26: #{transformer_forward.8} parent=19 // pred_check_branch
        %208 = sbr.rel (%p206) target = $region28
      $region27: #{transformer_forward.8} parent=19 // pred_region
        %p209 = scmp.lt.s32.totalorder %s18, 1
        %s210 = scalar_select %p209, %s18, 1
        %p211 = scmp.lt.s32.totalorder %s19, 7
        %s212 = scalar_select %p211, %s19, 7
        %s213 = smul.addr %s212, 2
        %s214 = smul.addr %s210, 16
        %s215 = sadd.s32 %s213, %s214
        %s216 = smul.addr %s215, 4
        %s217 = scalar_lea.vmem %s1, %s216
      $region28: #{transformer_forward.8} parent=19 // pred_fallthru
        _
      // Predicated region
      $region29: #{transformer_forward.8} parent=19 // pred_check
        %p218 = pneg %p97
      $region30: #{transformer_forward.8} parent=19 // pred_check_branch
        %220 = sbr.rel (%p218) target = $region32
      $region31: #{transformer_forward.8} parent=19 // pred_region
        %p221 = scmp.lt.s32.totalorder %s18, 1
        %s222 = scalar_select %p221, %s18, 1
        %s223 = scalar_lea.vmem %s2, %s222
      $region32: #{transformer_forward.8} parent=19 // pred_fallthru
        _
      // Predicated region
      $region33: #{transformer_forward.8} parent=19 // pred_check
        %p224 = pneg %p123
      $region34: #{transformer_forward.8} parent=19 // pred_check_branch
        %226 = sbr.rel (%p224) target = $region36
      $region35: #{transformer_forward.8} parent=19 // pred_region
        %p227 = scmp.lt.s32.totalorder %s19, 7
        %s228 = scalar_select %p227, %s19, 7
        %s229 = smul.addr %s228, 2
        %s230 = scalar_lea.vmem %s3, %s229
      $region36: #{transformer_forward.8} parent=19 // pred_fallthru
        _
    $region20: #{transformer_forward.8} parent=5 // pred_fallthru
      _
    %p231 = scmp.le.s32.totalorder 1, %s11
    %p232 = scmp.lt.s32.totalorder %s11, 17
    %p233 = pnand %p231, %p232
    %p234 = pneg %p233
    // Predicated region
    $region37: #{transformer_forward.8} parent=5 // pred_check
      _
    $region38: #{transformer_forward.8} parent=5 // pred_check_branch
      %236 = sbr.rel (%p233) target = $region40
    $region39: #{transformer_forward.8} parent=5 // pred_region
      %s237 = ssub.s32 %s11, 1
      %p238 = scmp.lt.s32.totalorder %s20, 1
      %s239 = scalar_select %p238, %s20, 1
      %s240 = smul.addr %s239, 2
      %s241 = smul.addr %s240, 8
      %s242 = scalar_lea.vmem %s0, %s241
      %p243 = pneg %p49
      %p244 = pneg %p46
      %p245 = scmp.lt.s32.totalorder %s20, 1
      %s246 = scalar_select %p245, %s20, 1
      %p247 = scmp.lt.s32.totalorder %s21, 7
      %s248 = scalar_select %p247, %s21, 7
      %s249 = smul.addr %s248, 2
      %s250 = smul.addr %s246, 16
      %s251 = sadd.s32 %s249, %s250
      %s252 = smul.addr %s251, 4
      %s253 = scalar_lea.vmem %s1, %s252
      %p254 = pneg %p77
      %p255 = pneg %p74
      %p256 = scmp.lt.s32.totalorder %s20, 1
      %s257 = scalar_select %p256, %s20, 1
      %s258 = scalar_lea.vmem %s2, %s257
      %p259 = pneg %p103
      %p260 = pneg %p100
      %p261 = scmp.lt.s32.totalorder %s21, 7
      %s262 = scalar_select %p261, %s21, 7
      %s263 = smul.addr %s262, 2
      %s264 = scalar_lea.vmem %s3, %s263
      %p265 = pneg %p129
      %p266 = pneg %p126
      %p267 = pneg %p150
      %p268 = pneg %p147
      %p269 = pneg %p176
      %p270 = pneg %p173
      %p271 = scmp.lt.s32.totalorder %s20, 1
      %s272 = scalar_select %p271, %s20, 1
      %s273 = smul.addr %s272, 2
      %s274 = smul.addr %s273, 8
      %s275 = scalar_lea.vmem %s5, %s274
      %p276 = scmp.lt.s32.totalorder %s20, 1
      %s277 = scalar_select %p276, %s20, 1
      %s278 = smul.addr %s277, 2
      %s279 = smul.addr %s278, 8
      %s280 = scalar_lea.vmem %s0, %s279
      %p281 = scmp.lt.s32.totalorder %s20, 1
      %s282 = scalar_select %p281, %s20, 1
      %p283 = scmp.lt.s32.totalorder %s21, 7
      %s284 = scalar_select %p283, %s21, 7
      %s285 = smul.addr %s284, 2
      %s286 = smul.addr %s282, 16
      %s287 = sadd.s32 %s285, %s286
      %s288 = smul.addr %s287, 4
      %s289 = scalar_lea.vmem %s1, %s288
      %p290 = scmp.lt.s32.totalorder %s20, 1
      %s291 = scalar_select %p290, %s20, 1
      %s292 = scalar_lea.vmem %s2, %s291
      %p293 = scmp.lt.s32.totalorder %s21, 7
      %s294 = scalar_select %p293, %s21, 7
      %s295 = smul.addr %s294, 2
      %s296 = scalar_lea.vmem %s3, %s295
      %p297 = scmp.lt.s32.totalorder %s20, 1
      %s298 = scalar_select %p297, %s20, 1
      %s299 = smul.addr %s298, 2
      %s300 = smul.addr %s299, 8
      %s301 = scalar_lea.vmem %s5, %s300
      %p303 = scmp.eq.s32.totalorder %s21, 0
      // Predicated region
      $region41: #{transformer_forward.8} parent=39 // pred_check
        %p304 = pneg %p303
      $region42: #{transformer_forward.8} parent=39 // pred_check_branch
        %306 = sbr.rel (%p304) target = $region44
      $region43: #{transformer_forward.8} parent=39 // pred_region
        %v307 = vld [vmem:[%s280] sm:$0xff]
        %v308 = vld [vmem:[%s280 + $0x8] sm:$0xff]
        %v309 = vld [vmem:[%s4] sm:$0x1]
        %v311 = vlaneseq
        %v312 = vshrl.u32 %v311, 7
        %v313 = vsub.s32 0, %v312
        %v314 = vrot.slane %v309, %v313
        %v316 = vadd.f32 %v307, %v314
        %v317 = vadd.f32 %v308, %v314
        %vm318 = vcmask 261120
        %319 = vst.msk [vmem:[%s301] sm:$0xff] %vm318, %v316
        %320 = vst.msk [vmem:[%s301 + $0x8] sm:$0xff] %vm318, %v317
      $region44: #{transformer_forward.8} parent=39 // pred_fallthru
        _
      %v321 = vld [vmem:[%s289] sm:$0xf]
      %v322 = vld [vmem:[%s289 + $0x4] sm:$0xf]
      %v325 = vunpack.c.l.b16 %v321
      %v326 = vunpack.c.l.b16 %v322
      %v327 = vpack.c.b16 %v326, %v325
      %328 = vrot.lane.b32.xlu0 %v327, 124
      %v329 = vpop.permute.xlu0 %328
      %vm330 = vcmask 31744
      %v332 = vsel %vm330, %v327, 0
      %v335 = vsel %vm330, %v329, 0
      %337 = vmatprep.subr.bf16.mxu0 0
      %338 = vmatpush1.bf16.xpose.msra.mxu0 0
      %339 = vmatprep.subr.bf16.mxu0 0
      %340 = vmatpush1.bf16.xpose.msra.mxu0 0
      %341 = vmatprep.subr.bf16.mxu0 0
      %342 = vmatpush1.bf16.xpose.msra.mxu0 0
      %343 = vmatprep.subr.bf16.mxu0 0
      %344 = vmatpush1.bf16.xpose.msra.mxu0 0
      %345 = vmatprep.subr.bf16.mxu0 0
      %346 = vmatpush1.bf16.xpose.msra.mxu0 0
      %347 = vmatprep.subr.bf16.mxu0 0
      %348 = vmatpush1.bf16.xpose.msra.mxu0 0
      %349 = vmatprep.subr.bf16.mxu0 0
      %350 = vmatpush1.bf16.xpose.msra.mxu0 0
      %351 = vmatprep.subr.bf16.mxu0 0
      %352 = vmatpush1.bf16.xpose.msra.mxu0 %v335
      %353 = vmatprep.subr.bf16.mxu0 0
      %354 = vmatpush2.bf16.xpose.msra.mxu0 0
      %355 = vmatprep.subr.bf16.mxu0 0
      %356 = vmatpush2.bf16.xpose.msra.mxu0 0
      %357 = vmatprep.subr.bf16.mxu0 0
      %358 = vmatpush2.bf16.xpose.msra.mxu0 0
      %359 = vmatprep.subr.bf16.mxu0 0
      %360 = vmatpush2.bf16.xpose.msra.mxu0 0
      %361 = vmatprep.subr.bf16.mxu0 0
      %362 = vmatpush2.bf16.xpose.msra.mxu0 0
      %363 = vmatprep.subr.bf16.mxu0 0
      %364 = vmatpush2.bf16.xpose.msra.mxu0 0
      %365 = vmatprep.subr.bf16.mxu0 0
      %366 = vmatpush2.bf16.xpose.msra.mxu0 0
      %367 = vmatprep.subr.bf16.mxu0 0
      %368 = vmatpush2.bf16.xpose.msra.mxu0 0
      %369 = vmatprep.mubr.bf16.mxu0 0
      %370 = vmatmul.mubr.bf16.gmra.mxu0 %v332
      %v371 = vpop.f32.mrf.mxu0
      %v372 = vadd.f32 0.0, %v371
      %v373 = vpop.f32.mrf.mxu0
      %v374 = vpop.f32.mrf.mxu0
      %v375 = vadd.f32 0.0, %v374
      %v376 = vpop.f32.mrf.mxu0
      %377 = vdwg.mxu0
      %v378 = vmul.f32 %v372, 0.5
      %v379 = vmul.f32 %v375, 0.5
      %v380 = vld [vmem:[%s292] sm:$0x1]
      %v382 = vlaneseq
      %v383 = vshrl.u32 %v382, 7
      %v384 = vsub.s32 0, %v383
      %v385 = vrot.slane %v380, %v384
      %v387 = vadd.f32 %v378, %v385
      %v388 = vadd.f32 %v379, %v385
      %vm389 = vcmask 130048
      %v390 = vsel %vm389, %v387, -inf
      %391 = vmax.xlane.f32.xlu0 %v390
      %v392 = vpop.xlane.xlu0 %391
      %v393 = vsel %vm389, %v388, -inf
      %394 = vmax.xlane.f32.xlu0 %v393
      %v395 = vpop.xlane.xlu0 %394
      %v396 = vsub.f32 %v387, %v392
      %v397 = vsub.f32 %v388, %v395
      %v398 = vmul.f32 %v396, 1.442695
      %v399 = vpow.pop %v398
      %v400 = vmul.f32 %v397, 1.442695
      %v401 = vpow.pop %v400
      %v402 = vsel %vm389, %v399, 0.0
      %403 = vadd.xlane.f32.xlu0 %v402
      %v404 = vpop.xlane.xlu0 %403
      %v405 = vsel %vm389, %v401, 0.0
      %406 = vadd.xlane.f32.xlu0 %v405
      %v407 = vpop.xlane.xlu0 %406
      %v408 = vrcp.pop %v404
      %v409 = vrcp.pop %v407
      %v410 = vmul.f32 %v399, %v408
      %v411 = vmul.f32 %v401, %v409
      %v412 = vpack.c.bf16 %v411, %v410
      %413 = vrot.lane.b32.xlu0 %v327, 120
      %v414 = vpop.permute.xlu0 %413
      %v417 = vsel %vm389, %v412, 0
      %419 = vmatprep.subr.bf16.mxu0 0
      %420 = vmatpush1.bf16.msra.mxu0 0
      %421 = vmatprep.subr.bf16.mxu0 0
      %422 = vmatpush1.bf16.msra.mxu0 0
      %423 = vmatprep.subr.bf16.mxu0 0
      %424 = vmatpush1.bf16.msra.mxu0 0
      %425 = vmatprep.subr.bf16.mxu0 0
      %426 = vmatpush1.bf16.msra.mxu0 0
      %427 = vmatprep.subr.bf16.mxu0 0
      %428 = vmatpush1.bf16.msra.mxu0 0
      %429 = vmatprep.subr.bf16.mxu0 0
      %430 = vmatpush1.bf16.msra.mxu0 0
      %431 = vmatprep.subr.bf16.mxu0 0
      %432 = vmatpush1.bf16.msra.mxu0 0
      %433 = vmatprep.subr.bf16.mxu0 0
      %434 = vmatpush1.bf16.msra.mxu0 %v414
      %435 = vmatprep.subr.bf16.mxu0 0
      %436 = vmatpush2.bf16.msra.mxu0 0
      %437 = vmatprep.subr.bf16.mxu0 0
      %438 = vmatpush2.bf16.msra.mxu0 0
      %439 = vmatprep.subr.bf16.mxu0 0
      %440 = vmatpush2.bf16.msra.mxu0 0
      %441 = vmatprep.subr.bf16.mxu0 0
      %442 = vmatpush2.bf16.msra.mxu0 0
      %443 = vmatprep.subr.bf16.mxu0 0
      %444 = vmatpush2.bf16.msra.mxu0 0
      %445 = vmatprep.subr.bf16.mxu0 0
      %446 = vmatpush2.bf16.msra.mxu0 0
      %447 = vmatprep.subr.bf16.mxu0 0
      %448 = vmatpush2.bf16.msra.mxu0 0
      %449 = vmatprep.subr.bf16.mxu0 0
      %450 = vmatpush2.bf16.msra.mxu0 0
      %451 = vmatprep.mubr.bf16.mxu0 0
      %452 = vmatmul.mubr.bf16.gmra.mxu0 %v417
      %v453 = vpop.f32.mrf.mxu0
      %v454 = vadd.f32 0.0, %v453
      %v455 = vpop.f32.mrf.mxu0
      %v456 = vpop.f32.mrf.mxu0
      %v457 = vadd.f32 0.0, %v456
      %v458 = vpop.f32.mrf.mxu0
      %459 = vdwg.mxu0
      %v460 = vpack.c.bf16 %v457, %v454
      %v461 = vld [vmem:[%s296] sm:$0x3]
      %v463 = vsel %vm330, %v460, 0
      %vm465 = vcmask 1041408
      %v467 = vsel %vm465, %v461, 0
      %469 = vmatprep.subr.bf16.mxu0 0
      %470 = vmatpush1.bf16.msra.mxu0 0
      %471 = vmatprep.subr.bf16.mxu0 0
      %472 = vmatpush1.bf16.msra.mxu0 0
      %473 = vmatprep.subr.bf16.mxu0 0
      %474 = vmatpush1.bf16.msra.mxu0 0
      %475 = vmatprep.subr.bf16.mxu0 0
      %476 = vmatpush1.bf16.msra.mxu0 0
      %477 = vmatprep.subr.bf16.mxu0 0
      %478 = vmatpush1.bf16.msra.mxu0 0
      %479 = vmatprep.subr.bf16.mxu0 0
      %480 = vmatpush1.bf16.msra.mxu0 0
      %481 = vmatprep.subr.bf16.mxu0 0
      %482 = vmatpush1.bf16.msra.mxu0 0
      %483 = vmatprep.subr.bf16.mxu0 0
      %484 = vmatpush1.bf16.msra.mxu0 %v467
      %485 = vmatprep.subr.bf16.mxu0 0
      %486 = vmatpush2.bf16.msra.mxu0 0
      %487 = vmatprep.subr.bf16.mxu0 0
      %488 = vmatpush2.bf16.msra.mxu0 0
      %489 = vmatprep.subr.bf16.mxu0 0
      %490 = vmatpush2.bf16.msra.mxu0 0
      %491 = vmatprep.subr.bf16.mxu0 0
      %492 = vmatpush2.bf16.msra.mxu0 0
      %493 = vmatprep.subr.bf16.mxu0 0
      %494 = vmatpush2.bf16.msra.mxu0 0
      %495 = vmatprep.subr.bf16.mxu0 0
      %496 = vmatpush2.bf16.msra.mxu0 0
      %497 = vmatprep.subr.bf16.mxu0 0
      %498 = vmatpush2.bf16.msra.mxu0 0
      %499 = vmatprep.subr.bf16.mxu0 0
      %500 = vmatpush2.bf16.msra.mxu0 0
      %501 = vmatprep.mubr.bf16.mxu0 0
      %502 = vmatmul.mubr.bf16.gmra.mxu0 %v463
      %v503 = vpop.f32.mrf.mxu0
      %v504 = vadd.f32 0.0, %v503
      %v505 = vpop.f32.mrf.mxu0
      %v506 = vpop.f32.mrf.mxu0
      %v507 = vadd.f32 0.0, %v506
      %v508 = vpop.f32.mrf.mxu0
      %509 = vdwg.mxu0
      %v510 = vld [vmem:[%s301] sm:$0xff]
      %v511 = vld [vmem:[%s301 + $0x8] sm:$0xff]
      %v512 = vadd.f32 %v510, %v504
      %v513 = vadd.f32 %v511, %v507
      %vm514 = vcmask 261120
      %515 = vst.msk [vmem:[%s301] sm:$0xff] %vm514, %v512
      %516 = vst.msk [vmem:[%s301 + $0x8] sm:$0xff] %vm514, %v513
      %p517 = scmp.lt.s32.totalorder %s20, 1
      %s518 = scalar_select %p517, %s20, 1
      %s519 = smul.addr %s518, 2
      %s520 = smul.addr %s519, 8
      %s521 = scalar_lea.vmem %s5, %s520
      // Predicated region
      $region45: #{transformer_forward.8} parent=39 // pred_check
        %p522 = pneg %p173
      $region46: #{transformer_forward.8} parent=39 // pred_check_branch
        %524 = sbr.rel (%p522) target = $region48
      $region47: #{transformer_forward.8} parent=39 // pred_region
        _
      $region48: #{transformer_forward.8} parent=39 // pred_fallthru
        _
    $region40: #{transformer_forward.8} parent=5 // pred_fallthru
      _
    %p525 = scmp.le.s32.totalorder 2, %s11
    // Predicated region
    $region49: #{transformer_forward.8} parent=5 // pred_check
      %p526 = pneg %p525
    $region50: #{transformer_forward.8} parent=5 // pred_check_branch
      %528 = sbr.rel (%p526) target = $region52
    $region51: #{transformer_forward.8} parent=5 // pred_region
      %s529 = ssub.s32 %s11, 2
      // Predicated region
      $region53: #{transformer_forward.8} parent=51 // pred_check
        %p530 = pneg %p179
      $region54: #{transformer_forward.8} parent=51 // pred_check_branch
        %532 = sbr.rel (%p530) target = $region56
      $region55: #{transformer_forward.8} parent=51 // pred_region
        %p533 = scmp.lt.s32.totalorder %s22, 1
        %s534 = scalar_select %p533, %s22, 1
        %s535 = smul.addr %s534, 2
        %s536 = smul.addr %s535, 8
        %s537 = scalar_lea.vmem %s5, %s536
      $region56: #{transformer_forward.8} parent=51 // pred_fallthru
        _
    $region52: #{transformer_forward.8} parent=5 // pred_fallthru
      _
  $region6: #{transformer_forward.8} parent=0 // loop_footer
    %s15 = sadd.s32 1, %s11
  $region7: #{transformer_forward.8} parent=0 // loop_footer_branch
    %10 = sbr.rel target = $region3
  $region8: #{transformer_forward.8} parent=0 // loop_exit
    _

// kernel: transformer_forward.9
$region0: #{transformer_forward.9}
  #allocation0 [shape = 'u32[]', space=smem, size = 0x4, offset = 0x4, fixed_abs, tag = 'smem constant byte address 0x4 - core index']
  #allocation1 [shape = 'u32[144,128]{1,0:T(1,128)}', space=vmem, size = 0x12000, scoped, tag = 'internal scratch']
  %s0 = inlined_call_operand.vmem [shape: f32[32,32], index: 0, kind: input, shape index: {}]
  %s1 = inlined_call_operand.vmem [shape: f32[1,32], index: 1, kind: input, shape index: {}]
  %s2 = inlined_call_operand.vmem [shape: f32[1,32], index: 2, kind: input, shape index: {}]
  %s3 = inlined_call_operand.vmem [shape: bf16[32,128], index: 3, kind: input, shape index: {}]
  %s4 = inlined_call_operand.vmem [shape: f32[1,128], index: 4, kind: input, shape index: {}]
  %s5 = inlined_call_operand.vmem [shape: bf16[128,32], index: 5, kind: input, shape index: {}]
  %s6 = inlined_call_operand.vmem [shape: f32[1,32], index: 6, kind: input, shape index: {}]
  %s7 = inlined_call_operand.vmem [shape: f32[32,32], index: 7, kind: output, shape index: {}]
  %s8 = sld [smem:[#allocation0]]
  $region38: #{transformer_forward.9} parent=0
    _
  %s10 = ssub.s32 1, %s8
  %s11 = scalar_select 0, %s10, %s8
  // Predicated region
  $region2: #{transformer_forward.9} parent=0 // pred_check
    _
  $region3: #{transformer_forward.9} parent=0 // pred_check_branch
    %13 = sbr.rel (0) target = $region5
  $region4: #{transformer_forward.9} parent=0 // pred_region
    _
  $region5: #{transformer_forward.9} parent=0 // pred_fallthru
    _
  // Predicated region
  $region6: #{transformer_forward.9} parent=0 // pred_check
    _
  $region7: #{transformer_forward.9} parent=0 // pred_check_branch
    %15 = sbr.rel (0) target = $region9
  $region8: #{transformer_forward.9} parent=0 // pred_region
    _
  $region9: #{transformer_forward.9} parent=0 // pred_fallthru
    _
  // Predicated region
  $region10: #{transformer_forward.9} parent=0 // pred_check
    _
  $region11: #{transformer_forward.9} parent=0 // pred_check_branch
    %17 = sbr.rel (0) target = $region13
  $region12: #{transformer_forward.9} parent=0 // pred_region
    _
  $region13: #{transformer_forward.9} parent=0 // pred_fallthru
    _
  // Predicated region
  $region14: #{transformer_forward.9} parent=0 // pred_check
    _
  $region15: #{transformer_forward.9} parent=0 // pred_check_branch
    %19 = sbr.rel (0) target = $region17
  $region16: #{transformer_forward.9} parent=0 // pred_region
    _
  $region17: #{transformer_forward.9} parent=0 // pred_fallthru
    _
  // Predicated region
  $region18: #{transformer_forward.9} parent=0 // pred_check
    _
  $region19: #{transformer_forward.9} parent=0 // pred_check_branch
    %21 = sbr.rel (0) target = $region21
  $region20: #{transformer_forward.9} parent=0 // pred_region
    _
  $region21: #{transformer_forward.9} parent=0 // pred_fallthru
    _
  // Predicated region
  $region22: #{transformer_forward.9} parent=0 // pred_check
    _
  $region23: #{transformer_forward.9} parent=0 // pred_check_branch
    %23 = sbr.rel (0) target = $region25
  $region24: #{transformer_forward.9} parent=0 // pred_region
    _
  $region25: #{transformer_forward.9} parent=0 // pred_fallthru
    _
  // Predicated region
  $region26: #{transformer_forward.9} parent=0 // pred_check
    _
  $region27: #{transformer_forward.9} parent=0 // pred_check_branch
    %25 = sbr.rel (0) target = $region29
  $region28: #{transformer_forward.9} parent=0 // pred_region
    _
  $region29: #{transformer_forward.9} parent=0 // pred_fallthru
    _
  %v27 = vld [vmem:[%s0] sm:$0xff]
  %v28 = vld [vmem:[%s0 + $0x8] sm:$0xff]
  %v29 = vld [vmem:[%s0 + $0x10] sm:$0xff]
  %v30 = vld [vmem:[%s0 + $0x18] sm:$0xff]
  %vm31 = vcmask 261120
  %v32 = vsel %vm31, %v27, 0.0
  %33 = vadd.xlane.f32.xlu0 %v32
  %v34 = vpop.xlane.xlu0 %33
  %v35 = vsel %vm31, %v28, 0.0
  %36 = vadd.xlane.f32.xlu0 %v35
  %v37 = vpop.xlane.xlu0 %36
  %v38 = vsel %vm31, %v29, 0.0
  %39 = vadd.xlane.f32.xlu0 %v38
  %v40 = vpop.xlane.xlu0 %39
  %v41 = vsel %vm31, %v30, 0.0
  %42 = vadd.xlane.f32.xlu0 %v41
  %v43 = vpop.xlane.xlu0 %42
  %v44 = vrcp.pop 32.0
  %v45 = vmul.f32 %v34, %v44
  %v46 = vmul.f32 %v37, %v44
  %v47 = vmul.f32 %v40, %v44
  %v48 = vmul.f32 %v43, %v44
  %v49 = vsub.f32 %v27, %v45
  %v50 = vsub.f32 %v28, %v46
  %v51 = vsub.f32 %v29, %v47
  %v52 = vsub.f32 %v30, %v48
  %v53 = vmul.f32 %v49, %v49
  %v54 = vmul.f32 %v50, %v50
  %v55 = vmul.f32 %v51, %v51
  %v56 = vmul.f32 %v52, %v52
  %v57 = vsel %vm31, %v53, 0.0
  %58 = vadd.xlane.f32.xlu0 %v57
  %v59 = vpop.xlane.xlu0 %58
  %v60 = vsel %vm31, %v54, 0.0
  %61 = vadd.xlane.f32.xlu0 %v60
  %v62 = vpop.xlane.xlu0 %61
  %v63 = vsel %vm31, %v55, 0.0
  %64 = vadd.xlane.f32.xlu0 %v63
  %v65 = vpop.xlane.xlu0 %64
  %v66 = vsel %vm31, %v56, 0.0
  %67 = vadd.xlane.f32.xlu0 %v66
  %v68 = vpop.xlane.xlu0 %67
  %v69 = vmul.f32 %v59, %v44
  %v70 = vmul.f32 %v62, %v44
  %v71 = vmul.f32 %v65, %v44
  %v72 = vmul.f32 %v68, %v44
  %v73 = vadd.f32 %v69, 1e-05
  %v74 = vadd.f32 %v70, 1e-05
  %v75 = vadd.f32 %v71, 1e-05
  %v76 = vadd.f32 %v72, 1e-05
  %v77 = vrsqrt.pop %v73
  %v78 = vrsqrt.pop %v74
  %v79 = vrsqrt.pop %v75
  %v80 = vrsqrt.pop %v76
  %v81 = vmul.f32 %v49, %v77
  %v82 = vmul.f32 %v50, %v78
  %v83 = vmul.f32 %v51, %v79
  %v84 = vmul.f32 %v52, %v80
  %v85 = vld [vmem:[%s1] sm:$0x1]
  %v87 = vlaneseq
  %v88 = vshrl.u32 %v87, 7
  %v89 = vsub.s32 0, %v88
  %v90 = vrot.slane %v85, %v89
  %v92 = vmul.f32 %v81, %v90
  %v93 = vmul.f32 %v82, %v90
  %v94 = vmul.f32 %v83, %v90
  %v95 = vmul.f32 %v84, %v90
  %v96 = vld [vmem:[%s2] sm:$0x1]
  %v98 = vlaneseq
  %v99 = vshrl.u32 %v98, 7
  %v100 = vsub.s32 0, %v99
  %v101 = vrot.slane %v96, %v100
  %v103 = vadd.f32 %v92, %v101
  %v104 = vadd.f32 %v93, %v101
  %v105 = vadd.f32 %v94, %v101
  %v106 = vadd.f32 %v95, %v101
  %v107 = vpack.c.bf16 %v104, %v103
  %v108 = vpack.c.bf16 %v106, %v105
  %v109 = vld [vmem:[%s3] sm:$0xf]
  %v110 = vld [vmem:[%s3 + $0x4] sm:$0xf]
  %v111 = vld [vmem:[%s3 + $0x8] sm:$0xf]
  %v112 = vld [vmem:[%s3 + $0xc] sm:$0xf]
  %v113 = vld [vmem:[%s4] sm:$0x1]
  %v115 = vlaneseq
  %v116 = vshrl.u32 %v115, 7
  %v117 = vsub.s32 0, %v116
  %v118 = vrot.slane %v113, %v117
  %v124 = vunpack.c.l.b16 %v109
  %v125 = vunpack.c.l.b16 %v110
  %v126 = vunpack.c.l.b16 %v111
  %v127 = vunpack.c.l.b16 %v112
  %v128 = vpack.c.b16 %v125, %v124
  %v129 = vpack.c.b16 %v127, %v126
  %v133 = vsel %vm31, %v107, 0
  %v136 = vsel %vm31, %v108, 0
  %138 = vmatprep.subr.bf16.mxu0 0
  %139 = vmatpush1.bf16.msra.mxu0 0
  %140 = vmatprep.subr.bf16.mxu0 0
  %141 = vmatpush1.bf16.msra.mxu0 0
  %142 = vmatprep.subr.bf16.mxu0 0
  %143 = vmatpush1.bf16.msra.mxu0 0
  %144 = vmatprep.subr.bf16.mxu0 0
  %145 = vmatpush1.bf16.msra.mxu0 0
  %146 = vmatprep.subr.bf16.mxu0 0
  %147 = vmatpush1.bf16.msra.mxu0 0
  %148 = vmatprep.subr.bf16.mxu0 0
  %149 = vmatpush1.bf16.msra.mxu0 0
  %150 = vmatprep.subr.bf16.mxu0 0
  %151 = vmatpush1.bf16.msra.mxu0 %v129
  %152 = vmatprep.subr.bf16.mxu0 0
  %153 = vmatpush1.bf16.msra.mxu0 %v128
  %154 = vmatprep.subr.bf16.mxu0 0
  %155 = vmatpush2.bf16.msra.mxu0 0
  %156 = vmatprep.subr.bf16.mxu0 0
  %157 = vmatpush2.bf16.msra.mxu0 0
  %158 = vmatprep.subr.bf16.mxu0 0
  %159 = vmatpush2.bf16.msra.mxu0 0
  %160 = vmatprep.subr.bf16.mxu0 0
  %161 = vmatpush2.bf16.msra.mxu0 0
  %162 = vmatprep.subr.bf16.mxu0 0
  %163 = vmatpush2.bf16.msra.mxu0 0
  %164 = vmatprep.subr.bf16.mxu0 0
  %165 = vmatpush2.bf16.msra.mxu0 0
  %166 = vmatprep.subr.bf16.mxu0 0
  %167 = vmatpush2.bf16.msra.mxu0 0
  %168 = vmatprep.subr.bf16.mxu0 0
  %169 = vmatpush2.bf16.msra.mxu0 0
  %170 = vmatprep.mubr.bf16.mxu0 0
  %171 = vmatmul.mubr.bf16.gmra.mxu0 %v133
  %v172 = vpop.f32.mrf.mxu0
  %v173 = vadd.f32 %v118, %v172
  %v174 = vpop.f32.mrf.mxu0
  %v175 = vpop.f32.mrf.mxu0
  %v176 = vadd.f32 %v118, %v175
  %v177 = vpop.f32.mrf.mxu0
  %178 = vmatprep.mubr.bf16.mxu0 0
  %179 = vmatmul.mubr.bf16.gmra.mxu0 %v136
  %v180 = vpop.f32.mrf.mxu0
  %v181 = vadd.f32 %v118, %v180
  %v182 = vpop.f32.mrf.mxu0
  %v183 = vpop.f32.mrf.mxu0
  %v184 = vadd.f32 %v118, %v183
  %v185 = vpop.f32.mrf.mxu0
  %186 = vdwg.mxu0
  %vm187 = vcmp.gt.f32.partialorder %v173, 0.0
  %vm188 = vcmp.gt.f32.partialorder %v176, 0.0
  %vm189 = vcmp.gt.f32.partialorder %v181, 0.0
  %vm190 = vcmp.gt.f32.partialorder %v184, 0.0
  %v191 = vmul.f32 %v173, 0.01
  %v192 = vmul.f32 %v176, 0.01
  %v193 = vmul.f32 %v181, 0.01
  %v194 = vmul.f32 %v184, 0.01
  %v195 = vsel %vm187, %v173, %v191
  %v196 = vsel %vm188, %v176, %v192
  %v197 = vsel %vm189, %v181, %v193
  %v198 = vsel %vm190, %v184, %v194
  %v199 = vpack.c.bf16 %v196, %v195
  %v200 = vpack.c.bf16 %v198, %v197
  %v201 = vld [vmem:[%s5] sm:$0xf]
  %v202 = vld [vmem:[%s5 + $0x4] sm:$0xf]
  %v203 = vld [vmem:[%s5 + $0x8] sm:$0xf]
  %v204 = vld [vmem:[%s5 + $0xc] sm:$0xf]
  %v205 = vld [vmem:[%s5 + $0x10] sm:$0xf]
  %v206 = vld [vmem:[%s5 + $0x14] sm:$0xf]
  %v207 = vld [vmem:[%s5 + $0x18] sm:$0xf]
  %v208 = vld [vmem:[%s5 + $0x1c] sm:$0xf]
  %v209 = vld [vmem:[%s5 + $0x20] sm:$0xf]
  %v210 = vld [vmem:[%s5 + $0x24] sm:$0xf]
  %v211 = vld [vmem:[%s5 + $0x28] sm:$0xf]
  %v212 = vld [vmem:[%s5 + $0x2c] sm:$0xf]
  %v213 = vld [vmem:[%s5 + $0x30] sm:$0xf]
  %v214 = vld [vmem:[%s5 + $0x34] sm:$0xf]
  %v215 = vld [vmem:[%s5 + $0x38] sm:$0xf]
  %v216 = vld [vmem:[%s5 + $0x3c] sm:$0xf]
  %v217 = vld [vmem:[%s6] sm:$0x1]
  %v219 = vlaneseq
  %v220 = vshrl.u32 %v219, 7
  %v221 = vsub.s32 0, %v220
  %v222 = vrot.slane %v217, %v221
  %v240 = vunpack.c.l.b16 %v201
  %v241 = vunpack.c.l.b16 %v202
  %v242 = vunpack.c.l.b16 %v203
  %v243 = vunpack.c.l.b16 %v204
  %v244 = vunpack.c.l.b16 %v205
  %v245 = vunpack.c.l.b16 %v206
  %v246 = vunpack.c.l.b16 %v207
  %v247 = vunpack.c.l.b16 %v208
  %v248 = vunpack.c.l.b16 %v209
  %v249 = vunpack.c.l.b16 %v210
  %v250 = vunpack.c.l.b16 %v211
  %v251 = vunpack.c.l.b16 %v212
  %v252 = vunpack.c.l.b16 %v213
  %v253 = vunpack.c.l.b16 %v214
  %v254 = vunpack.c.l.b16 %v215
  %v255 = vunpack.c.l.b16 %v216
  %v256 = vpack.c.b16 %v241, %v240
  %v257 = vpack.c.b16 %v243, %v242
  %v258 = vpack.c.b16 %v245, %v244
  %v259 = vpack.c.b16 %v247, %v246
  %v260 = vpack.c.b16 %v249, %v248
  %v261 = vpack.c.b16 %v251, %v250
  %v262 = vpack.c.b16 %v253, %v252
  %v263 = vpack.c.b16 %v255, %v254
  %272 = vmatprep.subr.bf16.mxu0 0
  %273 = vmatpush1.bf16.msra.mxu0 %v263
  %274 = vmatprep.subr.bf16.mxu0 0
  %275 = vmatpush1.bf16.msra.mxu0 %v262
  %276 = vmatprep.subr.bf16.mxu0 0
  %277 = vmatpush1.bf16.msra.mxu0 %v261
  %278 = vmatprep.subr.bf16.mxu0 0
  %279 = vmatpush1.bf16.msra.mxu0 %v260
  %280 = vmatprep.subr.bf16.mxu0 0
  %281 = vmatpush1.bf16.msra.mxu0 %v259
  %282 = vmatprep.subr.bf16.mxu0 0
  %283 = vmatpush1.bf16.msra.mxu0 %v258
  %284 = vmatprep.subr.bf16.mxu0 0
  %285 = vmatpush1.bf16.msra.mxu0 %v257
  %286 = vmatprep.subr.bf16.mxu0 0
  %287 = vmatpush1.bf16.msra.mxu0 %v256
  %288 = vmatprep.subr.bf16.mxu0 0
  %289 = vmatpush2.bf16.msra.mxu0 0
  %290 = vmatprep.subr.bf16.mxu0 0
  %291 = vmatpush2.bf16.msra.mxu0 0
  %292 = vmatprep.subr.bf16.mxu0 0
  %293 = vmatpush2.bf16.msra.mxu0 0
  %294 = vmatprep.subr.bf16.mxu0 0
  %295 = vmatpush2.bf16.msra.mxu0 0
  %296 = vmatprep.subr.bf16.mxu0 0
  %297 = vmatpush2.bf16.msra.mxu0 0
  %298 = vmatprep.subr.bf16.mxu0 0
  %299 = vmatpush2.bf16.msra.mxu0 0
  %300 = vmatprep.subr.bf16.mxu0 0
  %301 = vmatpush2.bf16.msra.mxu0 0
  %302 = vmatprep.subr.bf16.mxu0 0
  %303 = vmatpush2.bf16.msra.mxu0 0
  %304 = vmatprep.mubr.bf16.mxu0 0
  %305 = vmatmul.mubr.bf16.gmra.mxu0 %v199
  %v306 = vpop.f32.mrf.mxu0
  %v307 = vadd.f32 %v222, %v306
  %v308 = vpop.f32.mrf.mxu0
  %v309 = vpop.f32.mrf.mxu0
  %v310 = vadd.f32 %v222, %v309
  %v311 = vpop.f32.mrf.mxu0
  %312 = vmatprep.mubr.bf16.mxu0 0
  %313 = vmatmul.mubr.bf16.gmra.mxu0 %v200
  %v314 = vpop.f32.mrf.mxu0
  %v315 = vadd.f32 %v222, %v314
  %v316 = vpop.f32.mrf.mxu0
  %v317 = vpop.f32.mrf.mxu0
  %v318 = vadd.f32 %v222, %v317
  %v319 = vpop.f32.mrf.mxu0
  %320 = vdwg.mxu0
  %v321 = vadd.f32 %v27, %v307
  %v322 = vadd.f32 %v28, %v310
  %v323 = vadd.f32 %v29, %v315
  %v324 = vadd.f32 %v30, %v318
  %325 = vst.msk [vmem:[%s7] sm:$0xff] %vm31, %v321
  %326 = vst.msk [vmem:[%s7 + $0x8] sm:$0xff] %vm31, %v322
  %327 = vst.msk [vmem:[%s7 + $0x10] sm:$0xff] %vm31, %v323
  %328 = vst.msk [vmem:[%s7 + $0x18] sm:$0xff] %vm31, %v324
  // Predicated region
  $region30: #{transformer_forward.9} parent=0 // pred_check
    _
  $region31: #{transformer_forward.9} parent=0 // pred_check_branch
    %330 = sbr.rel (0) target = $region33
  $region32: #{transformer_forward.9} parent=0 // pred_region
    _
  $region33: #{transformer_forward.9} parent=0 // pred_fallthru
    _
  // Predicated region
  $region34: #{transformer_forward.9} parent=0 // pred_check
    _
  $region35: #{transformer_forward.9} parent=0 // pred_check_branch
    %332 = sbr.rel (0) target = $region37
  $region36: #{transformer_forward.9} parent=0 // pred_region
    _
  $region37: #{transformer_forward.9} parent=0 // pred_fallthru
    _

// kernel: transformer_forward.13
$region0: #{transformer_forward.13}
  #allocation0 [shape = 'u32[]', space=smem, size = 0x4, offset = 0x4, fixed_abs, tag = 'smem constant byte address 0x4 - core index']
  #allocation1 [shape = 'u32[144,128]{1,0:T(1,128)}', space=vmem, size = 0x12000, scoped, tag = 'internal scratch']
  #allocation2 [shape = 'bf16[32,32]{1,0:T(8,128)(2,1)}', space=vmem, size = 0x2000, scoped, tag = 'scratch operand']
  #allocation3 [shape = 'f32[32,1]{1,0:T(8,128)}', space=vmem, size = 0x4000, scoped, tag = 'scratch operand']
  #allocation4 [shape = 'f32[32,1]{1,0:T(8,128)}', space=vmem, size = 0x4000, scoped, tag = 'scratch operand']
  #allocation5 [shape = 'f32[32,1]{1,0:T(8,128)}', space=vmem, size = 0x4000, scoped, tag = 'scratch operand']
  %s0 = inlined_call_operand.vmem [shape: f32[32,32], index: 0, kind: input, shape index: {}]
  %s1 = inlined_call_operand.vmem [shape: f32[1,32], index: 1, kind: input, shape index: {}]
  %s2 = inlined_call_operand.vmem [shape: f32[1,32], index: 2, kind: input, shape index: {}]
  %s3 = inlined_call_operand.vmem [shape: bf16[64,32], index: 3, kind: input, shape index: {}]
  %s4 = inlined_call_operand.vmem [shape: f32[1,64], index: 4, kind: input, shape index: {}]
  %s5 = inlined_call_operand.vmem [shape: s32[32,1], index: 5, kind: input, shape index: {}]
  %s6 = inlined_call_operand.vmem [shape: f32[32,1], index: 6, kind: output, shape index: {0}]
  %s7 = inlined_call_operand.hbm [shape: f32[32,32], index: 7, kind: output, shape index: {1}]
  %8 = xla_tuple %s6, %s7
  %s9 = sld [smem:[#allocation0]]
  $region50: #{transformer_forward.13} parent=0
    _
  %s11 = ssub.s32 1, %s9
  %s12 = scalar_select 0, %s11, %s9
  $region1: #{transformer_forward.13} parent=0
    #allocation6 [shape = 'u8[16384]{0}', space=vmem, size = 0x4000, scoped, tag = 'output window, operand 1, single buffered']
    #allocation7 [shape = 's32[1]{0}', space=sflag, size = 0x4, scoped, tag = 'scoped memory for transformer_forward.13']
    %13 = vsyncpa [#allocation7], 0
    // Predicated region
    $region2: #{transformer_forward.13} parent=1 // pred_check
      _
    $region3: #{transformer_forward.13} parent=1 // pred_check_branch
      %15 = sbr.rel (0) target = $region5
    $region4: #{transformer_forward.13} parent=1 // pred_region
      _
    $region5: #{transformer_forward.13} parent=1 // pred_fallthru
      _
    // Predicated region
    $region6: #{transformer_forward.13} parent=1 // pred_check
      _
    $region7: #{transformer_forward.13} parent=1 // pred_check_branch
      %17 = sbr.rel (0) target = $region9
    $region8: #{transformer_forward.13} parent=1 // pred_region
      _
    $region9: #{transformer_forward.13} parent=1 // pred_fallthru
      _
    // Predicated region
    $region10: #{transformer_forward.13} parent=1 // pred_check
      _
    $region11: #{transformer_forward.13} parent=1 // pred_check_branch
      %19 = sbr.rel (0) target = $region13
    $region12: #{transformer_forward.13} parent=1 // pred_region
      _
    $region13: #{transformer_forward.13} parent=1 // pred_fallthru
      _
    // Predicated region
    $region14: #{transformer_forward.13} parent=1 // pred_check
      _
    $region15: #{transformer_forward.13} parent=1 // pred_check_branch
      %21 = sbr.rel (0) target = $region17
    $region16: #{transformer_forward.13} parent=1 // pred_region
      _
    $region17: #{transformer_forward.13} parent=1 // pred_fallthru
      _
    // Predicated region
    $region18: #{transformer_forward.13} parent=1 // pred_check
      _
    $region19: #{transformer_forward.13} parent=1 // pred_check_branch
      %23 = sbr.rel (0) target = $region21
    $region20: #{transformer_forward.13} parent=1 // pred_region
      _
    $region21: #{transformer_forward.13} parent=1 // pred_fallthru
      _
    // Predicated region
    $region22: #{transformer_forward.13} parent=1 // pred_check
      _
    $region23: #{transformer_forward.13} parent=1 // pred_check_branch
      %25 = sbr.rel (0) target = $region25
    $region24: #{transformer_forward.13} parent=1 // pred_region
      _
    $region25: #{transformer_forward.13} parent=1 // pred_fallthru
      _
    %p27 = scmp.eq.s32.totalorder 0, 0
    // Predicated region
    $region26: #{transformer_forward.13} parent=1 // pred_check
      %p28 = pneg %p27
    $region27: #{transformer_forward.13} parent=1 // pred_check_branch
      %30 = sbr.rel (%p28) target = $region29
    $region28: #{transformer_forward.13} parent=1 // pred_region
      %v31 = vld [vmem:[%s0] sm:$0xff]
      %v32 = vld [vmem:[%s0 + $0x8] sm:$0xff]
      %v33 = vld [vmem:[%s0 + $0x10] sm:$0xff]
      %v34 = vld [vmem:[%s0 + $0x18] sm:$0xff]
      %vm35 = vcmask 261120
      %v36 = vsel %vm35, %v31, 0.0
      %37 = vadd.xlane.f32.xlu0 %v36
      %v38 = vpop.xlane.xlu0 %37
      %v39 = vsel %vm35, %v32, 0.0
      %40 = vadd.xlane.f32.xlu0 %v39
      %v41 = vpop.xlane.xlu0 %40
      %v42 = vsel %vm35, %v33, 0.0
      %43 = vadd.xlane.f32.xlu0 %v42
      %v44 = vpop.xlane.xlu0 %43
      %v45 = vsel %vm35, %v34, 0.0
      %46 = vadd.xlane.f32.xlu0 %v45
      %v47 = vpop.xlane.xlu0 %46
      %v48 = vrcp.pop 32.0
      %v49 = vmul.f32 %v38, %v48
      %v50 = vmul.f32 %v41, %v48
      %v51 = vmul.f32 %v44, %v48
      %v52 = vmul.f32 %v47, %v48
      %v53 = vsub.f32 %v31, %v49
      %v54 = vsub.f32 %v32, %v50
      %v55 = vsub.f32 %v33, %v51
      %v56 = vsub.f32 %v34, %v52
      %v57 = vmul.f32 %v53, %v53
      %v58 = vmul.f32 %v54, %v54
      %v59 = vmul.f32 %v55, %v55
      %v60 = vmul.f32 %v56, %v56
      %v61 = vsel %vm35, %v57, 0.0
      %62 = vadd.xlane.f32.xlu0 %v61
      %v63 = vpop.xlane.xlu0 %62
      %v64 = vsel %vm35, %v58, 0.0
      %65 = vadd.xlane.f32.xlu0 %v64
      %v66 = vpop.xlane.xlu0 %65
      %v67 = vsel %vm35, %v59, 0.0
      %68 = vadd.xlane.f32.xlu0 %v67
      %v69 = vpop.xlane.xlu0 %68
      %v70 = vsel %vm35, %v60, 0.0
      %71 = vadd.xlane.f32.xlu0 %v70
      %v72 = vpop.xlane.xlu0 %71
      %v73 = vmul.f32 %v63, %v48
      %v74 = vmul.f32 %v66, %v48
      %v75 = vmul.f32 %v69, %v48
      %v76 = vmul.f32 %v72, %v48
      %v77 = vadd.f32 %v73, 1e-05
      %v78 = vadd.f32 %v74, 1e-05
      %v79 = vadd.f32 %v75, 1e-05
      %v80 = vadd.f32 %v76, 1e-05
      %v81 = vrsqrt.pop %v77
      %v82 = vrsqrt.pop %v78
      %v83 = vrsqrt.pop %v79
      %v84 = vrsqrt.pop %v80
      %v85 = vmul.f32 %v53, %v81
      %v86 = vmul.f32 %v54, %v82
      %v87 = vmul.f32 %v55, %v83
      %v88 = vmul.f32 %v56, %v84
      %v89 = vld [vmem:[%s1] sm:$0x1]
      %v91 = vlaneseq
      %v92 = vshrl.u32 %v91, 7
      %v93 = vsub.s32 0, %v92
      %v94 = vrot.slane %v89, %v93
      %v96 = vmul.f32 %v85, %v94
      %v97 = vmul.f32 %v86, %v94
      %v98 = vmul.f32 %v87, %v94
      %v99 = vmul.f32 %v88, %v94
      %v100 = vld [vmem:[%s2] sm:$0x1]
      %v102 = vlaneseq
      %v103 = vshrl.u32 %v102, 7
      %v104 = vsub.s32 0, %v103
      %v105 = vrot.slane %v100, %v104
      %v107 = vadd.f32 %v96, %v105
      %v108 = vadd.f32 %v97, %v105
      %v109 = vadd.f32 %v98, %v105
      %v110 = vadd.f32 %v99, %v105
      %111 = vst.msk [vmem:[#allocation6] sm:$0xff] %vm35, %v107
      %112 = vst.msk [vmem:[#allocation6 + $0x8] sm:$0xff] %vm35, %v108
      %113 = vst.msk [vmem:[#allocation6 + $0x10] sm:$0xff] %vm35, %v109
      %114 = vst.msk [vmem:[#allocation6 + $0x18] sm:$0xff] %vm35, %v110
      %v115 = vpack.c.bf16 %v108, %v107
      %v116 = vpack.c.bf16 %v110, %v109
      %v119 = vunpack.c.l.b16 %v115
      %v120 = vunpack.c.h.b16 %v115
      %v121 = vunpack.c.l.b16 %v116
      %v122 = vunpack.c.h.b16 %v116
      %v123 = vpack.c.b16 %v119, %v119
      %v124 = vpack.c.b16 %v120, %v120
      %v125 = vpack.c.b16 %v121, %v121
      %v126 = vpack.c.b16 %v122, %v122
      %vm131 = vcmask 257024
      %132 = vst.msk [vmem:[#allocation2] sm:$0xf] %vm131, %v123
      %133 = vst.msk [vmem:[#allocation2 + $0x4] sm:$0xf] %vm131, %v124
      %134 = vst.msk [vmem:[#allocation2 + $0x8] sm:$0xf] %vm131, %v125
      %135 = vst.msk [vmem:[#allocation2 + $0xc] sm:$0xf] %vm131, %v126
      %vm136 = vcmask 7168
      %137 = vst.msk [vmem:[#allocation3] sm:$0xff] %vm136, -inf
      %138 = vst.msk [vmem:[#allocation3 + $0x8] sm:$0xff] %vm136, -inf
      %139 = vst.msk [vmem:[#allocation3 + $0x10] sm:$0xff] %vm136, -inf
      %140 = vst.msk [vmem:[#allocation3 + $0x18] sm:$0xff] %vm136, -inf
      %141 = vst.msk [vmem:[#allocation4] sm:$0xff] %vm136, 0.0
      %142 = vst.msk [vmem:[#allocation4 + $0x8] sm:$0xff] %vm136, 0.0
      %143 = vst.msk [vmem:[#allocation4 + $0x10] sm:$0xff] %vm136, 0.0
      %144 = vst.msk [vmem:[#allocation4 + $0x18] sm:$0xff] %vm136, 0.0
      %145 = vst.msk [vmem:[#allocation5] sm:$0xff] %vm136, 0.0
      %146 = vst.msk [vmem:[#allocation5 + $0x8] sm:$0xff] %vm136, 0.0
      %147 = vst.msk [vmem:[#allocation5 + $0x10] sm:$0xff] %vm136, 0.0
      %148 = vst.msk [vmem:[#allocation5 + $0x18] sm:$0xff] %vm136, 0.0
    $region29: #{transformer_forward.13} parent=1 // pred_fallthru
      _
    %v149 = vld [vmem:[#allocation2] sm:$0xf]
    %v150 = vld [vmem:[#allocation2 + $0x4] sm:$0xf]
    %v151 = vld [vmem:[#allocation2 + $0x8] sm:$0xf]
    %v152 = vld [vmem:[#allocation2 + $0xc] sm:$0xf]
    %v153 = vld [vmem:[%s3] sm:$0xf]
    %v154 = vld [vmem:[%s3 + $0x4] sm:$0xf]
    %v155 = vld [vmem:[%s3 + $0x8] sm:$0xf]
    %v156 = vld [vmem:[%s3 + $0xc] sm:$0xf]
    %v157 = vld [vmem:[%s3 + $0x10] sm:$0xf]
    %v158 = vld [vmem:[%s3 + $0x14] sm:$0xf]
    %v159 = vld [vmem:[%s3 + $0x18] sm:$0xf]
    %v160 = vld [vmem:[%s3 + $0x1c] sm:$0xf]
    %v161 = vld [vmem:[%s4] sm:$0x1]
    %v163 = vlaneseq
    %v164 = vshrl.u32 %v163, 7
    %v165 = vsub.s32 0, %v164
    %v166 = vrot.slane %v161, %v165
    %v172 = vunpack.c.l.b16 %v149
    %v173 = vunpack.c.l.b16 %v150
    %v174 = vunpack.c.l.b16 %v151
    %v175 = vunpack.c.l.b16 %v152
    %v176 = vpack.c.b16 %v173, %v172
    %v177 = vpack.c.b16 %v175, %v174
    %v186 = vunpack.c.l.b16 %v153
    %v187 = vunpack.c.l.b16 %v154
    %v188 = vunpack.c.l.b16 %v155
    %v189 = vunpack.c.l.b16 %v156
    %v190 = vunpack.c.l.b16 %v157
    %v191 = vunpack.c.l.b16 %v158
    %v192 = vunpack.c.l.b16 %v159
    %v193 = vunpack.c.l.b16 %v160
    %v194 = vpack.c.b16 %v187, %v186
    %v195 = vpack.c.b16 %v189, %v188
    %v196 = vpack.c.b16 %v191, %v190
    %v197 = vpack.c.b16 %v193, %v192
    %vm198 = vcmask 261120
    %v200 = vsel %vm198, %v176, 0
    %v203 = vsel %vm198, %v177, 0
    %v206 = vsel %vm198, %v194, 0
    %v209 = vsel %vm198, %v195, 0
    %v212 = vsel %vm198, %v196, 0
    %v215 = vsel %vm198, %v197, 0
    %217 = vmatprep.subr.bf16.mxu0 0
    %218 = vmatpush1.bf16.xpose.msra.mxu0 0
    %219 = vmatprep.subr.bf16.mxu0 0
    %220 = vmatpush1.bf16.xpose.msra.mxu0 0
    %221 = vmatprep.subr.bf16.mxu0 0
    %222 = vmatpush1.bf16.xpose.msra.mxu0 0
    %223 = vmatprep.subr.bf16.mxu0 0
    %224 = vmatpush1.bf16.xpose.msra.mxu0 0
    %225 = vmatprep.subr.bf16.mxu0 0
    %226 = vmatpush1.bf16.xpose.msra.mxu0 %v215
    %227 = vmatprep.subr.bf16.mxu0 0
    %228 = vmatpush1.bf16.xpose.msra.mxu0 %v212
    %229 = vmatprep.subr.bf16.mxu0 0
    %230 = vmatpush1.bf16.xpose.msra.mxu0 %v209
    %231 = vmatprep.subr.bf16.mxu0 0
    %232 = vmatpush1.bf16.xpose.msra.mxu0 %v206
    %233 = vmatprep.subr.bf16.mxu0 0
    %234 = vmatpush2.bf16.xpose.msra.mxu0 0
    %235 = vmatprep.subr.bf16.mxu0 0
    %236 = vmatpush2.bf16.xpose.msra.mxu0 0
    %237 = vmatprep.subr.bf16.mxu0 0
    %238 = vmatpush2.bf16.xpose.msra.mxu0 0
    %239 = vmatprep.subr.bf16.mxu0 0
    %240 = vmatpush2.bf16.xpose.msra.mxu0 0
    %241 = vmatprep.subr.bf16.mxu0 0
    %242 = vmatpush2.bf16.xpose.msra.mxu0 0
    %243 = vmatprep.subr.bf16.mxu0 0
    %244 = vmatpush2.bf16.xpose.msra.mxu0 0
    %245 = vmatprep.subr.bf16.mxu0 0
    %246 = vmatpush2.bf16.xpose.msra.mxu0 0
    %247 = vmatprep.subr.bf16.mxu0 0
    %248 = vmatpush2.bf16.xpose.msra.mxu0 0
    %249 = vmatprep.mubr.bf16.mxu0 0
    %250 = vmatmul.mubr.bf16.gmra.mxu0 %v200
    %v251 = vpop.f32.mrf.mxu0
    %v252 = vadd.f32 %v166, %v251
    %v253 = vpop.f32.mrf.mxu0
    %v254 = vpop.f32.mrf.mxu0
    %v255 = vadd.f32 %v166, %v254
    %v256 = vpop.f32.mrf.mxu0
    %257 = vmatprep.mubr.bf16.mxu0 0
    %258 = vmatmul.mubr.bf16.gmra.mxu0 %v203
    %v259 = vpop.f32.mrf.mxu0
    %v260 = vadd.f32 %v166, %v259
    %v261 = vpop.f32.mrf.mxu0
    %v262 = vpop.f32.mrf.mxu0
    %v263 = vadd.f32 %v166, %v262
    %v264 = vpop.f32.mrf.mxu0
    %265 = vdwg.mxu0
    %v266 = vld [vmem:[%s5] sm:$0xff]
    %v267 = vld [vmem:[%s5 + $0x8] sm:$0xff]
    %v268 = vld [vmem:[%s5 + $0x10] sm:$0xff]
    %v269 = vld [vmem:[%s5 + $0x18] sm:$0xff]
    %s270 = smul.u32 0, 64
    %v271 = vlaneseq
    %v272 = vand.u32 %v271, 127
    %v273 = vstv %s270
    %v274 = vadd.s32 %v273, %v272
    %v275 = vld [vmem:[#allocation5] sm:$0xff]
    %v276 = vld [vmem:[#allocation5 + $0x8] sm:$0xff]
    %v277 = vld [vmem:[#allocation5 + $0x10] sm:$0xff]
    %v278 = vld [vmem:[#allocation5 + $0x18] sm:$0xff]
    %279 = vset.pattern.permute.xlu0 0
    %280 = vperm.xlu0 %279, %v266
    %v281 = vpop.permute.xlu0 %280
    %282 = vset.pattern.permute.xlu0 0
    %283 = vperm.xlu0 %282, %v267
    %v284 = vpop.permute.xlu0 %283
    %285 = vset.pattern.permute.xlu0 0
    %286 = vperm.xlu0 %285, %v268
    %v287 = vpop.permute.xlu0 %286
    %288 = vset.pattern.permute.xlu0 0
    %289 = vperm.xlu0 %288, %v269
    %v290 = vpop.permute.xlu0 %289
    %vm291 = vcmp.eq.s32.totalorder %v274, %v281
    %vm292 = vcmp.eq.s32.totalorder %v274, %v284
    %vm293 = vcmp.eq.s32.totalorder %v274, %v287
    %vm294 = vcmp.eq.s32.totalorder %v274, %v290
    %v295 = vsel %vm291, %v252, 0.0
    %v296 = vsel %vm292, %v255, 0.0
    %v297 = vsel %vm293, %v260, 0.0
    %v298 = vsel %vm294, %v263, 0.0
    %vm299 = vcmask 523264
    %v300 = vsel %vm299, %v295, 0.0
    %301 = vadd.xlane.f32.xlu0 %v300
    %v302 = vpop.xlane.xlu0 %301
    %v303 = vsel %vm299, %v296, 0.0
    %304 = vadd.xlane.f32.xlu0 %v303
    %v305 = vpop.xlane.xlu0 %304
    %v306 = vsel %vm299, %v297, 0.0
    %307 = vadd.xlane.f32.xlu0 %v306
    %v308 = vpop.xlane.xlu0 %307
    %v309 = vsel %vm299, %v298, 0.0
    %310 = vadd.xlane.f32.xlu0 %v309
    %v311 = vpop.xlane.xlu0 %310
    %v312 = vadd.f32 %v275, %v302
    %v313 = vadd.f32 %v276, %v305
    %v314 = vadd.f32 %v277, %v308
    %v315 = vadd.f32 %v278, %v311
    %vm316 = vcmask 7168
    %317 = vst.msk [vmem:[#allocation5] sm:$0xff] %vm316, %v312
    %318 = vst.msk [vmem:[#allocation5 + $0x8] sm:$0xff] %vm316, %v313
    %319 = vst.msk [vmem:[#allocation5 + $0x10] sm:$0xff] %vm316, %v314
    %320 = vst.msk [vmem:[#allocation5 + $0x18] sm:$0xff] %vm316, %v315
    %v321 = vld [vmem:[#allocation3] sm:$0xff]
    %v322 = vld [vmem:[#allocation3 + $0x8] sm:$0xff]
    %v323 = vld [vmem:[#allocation3 + $0x10] sm:$0xff]
    %v324 = vld [vmem:[#allocation3 + $0x18] sm:$0xff]
    %v325 = vsel %vm299, %v252, -inf
    %326 = vmax.xlane.f32.xlu0 %v325
    %v327 = vpop.xlane.xlu0 %326
    %v328 = vsel %vm299, %v255, -inf
    %329 = vmax.xlane.f32.xlu0 %v328
    %v330 = vpop.xlane.xlu0 %329
    %v331 = vsel %vm299, %v260, -inf
    %332 = vmax.xlane.f32.xlu0 %v331
    %v333 = vpop.xlane.xlu0 %332
    %v334 = vsel %vm299, %v263, -inf
    %335 = vmax.xlane.f32.xlu0 %v334
    %v336 = vpop.xlane.xlu0 %335
    %v337 = vmax.f32 %v321, %v327
    %v338 = vmax.f32 %v322, %v330
    %v339 = vmax.f32 %v323, %v333
    %v340 = vmax.f32 %v324, %v336
    %v341 = vld [vmem:[#allocation4] sm:$0xff]
    %v342 = vld [vmem:[#allocation4 + $0x8] sm:$0xff]
    %v343 = vld [vmem:[#allocation4 + $0x10] sm:$0xff]
    %v344 = vld [vmem:[#allocation4 + $0x18] sm:$0xff]
    %v345 = vsub.f32 %v321, %v337
    %v346 = vsub.f32 %v322, %v338
    %v347 = vsub.f32 %v323, %v339
    %v348 = vsub.f32 %v324, %v340
    %v349 = vmul.f32 %v345, 1.442695
    %v350 = vpow.pop %v349
    %v351 = vmul.f32 %v346, 1.442695
    %v352 = vpow.pop %v351
    %v353 = vmul.f32 %v347, 1.442695
    %v354 = vpow.pop %v353
    %v355 = vmul.f32 %v348, 1.442695
    %v356 = vpow.pop %v355
    %v357 = vmul.f32 %v341, %v350
    %v358 = vmul.f32 %v342, %v352
    %v359 = vmul.f32 %v343, %v354
    %v360 = vmul.f32 %v344, %v356
    %362 = vset.pattern.permute.xlu0 0
    %363 = vperm.xlu0 %362, %v337
    %v364 = vpop.permute.xlu0 %363
    %367 = vset.pattern.permute.xlu0 0
    %368 = vperm.xlu0 %367, %v338
    %v369 = vpop.permute.xlu0 %368
    %372 = vset.pattern.permute.xlu0 0
    %373 = vperm.xlu0 %372, %v339
    %v374 = vpop.permute.xlu0 %373
    %377 = vset.pattern.permute.xlu0 0
    %378 = vperm.xlu0 %377, %v340
    %v379 = vpop.permute.xlu0 %378
    %v381 = vsub.f32 %v252, %v364
    %v382 = vsub.f32 %v255, %v369
    %v383 = vsub.f32 %v260, %v374
    %v384 = vsub.f32 %v263, %v379
    %v385 = vmul.f32 %v381, 1.442695
    %v386 = vpow.pop %v385
    %v387 = vmul.f32 %v382, 1.442695
    %v388 = vpow.pop %v387
    %v389 = vmul.f32 %v383, 1.442695
    %v390 = vpow.pop %v389
    %v391 = vmul.f32 %v384, 1.442695
    %v392 = vpow.pop %v391
    %v393 = vsel %vm299, %v386, 0.0
    %394 = vadd.xlane.f32.xlu0 %v393
    %v395 = vpop.xlane.xlu0 %394
    %v396 = vsel %vm299, %v388, 0.0
    %397 = vadd.xlane.f32.xlu0 %v396
    %v398 = vpop.xlane.xlu0 %397
    %v399 = vsel %vm299, %v390, 0.0
    %400 = vadd.xlane.f32.xlu0 %v399
    %v401 = vpop.xlane.xlu0 %400
    %v402 = vsel %vm299, %v392, 0.0
    %403 = vadd.xlane.f32.xlu0 %v402
    %v404 = vpop.xlane.xlu0 %403
    %v405 = vadd.f32 %v357, %v395
    %v406 = vadd.f32 %v358, %v398
    %v407 = vadd.f32 %v359, %v401
    %v408 = vadd.f32 %v360, %v404
    %409 = vst.msk [vmem:[#allocation4] sm:$0xff] %vm316, %v405
    %410 = vst.msk [vmem:[#allocation4 + $0x8] sm:$0xff] %vm316, %v406
    %411 = vst.msk [vmem:[#allocation4 + $0x10] sm:$0xff] %vm316, %v407
    %412 = vst.msk [vmem:[#allocation4 + $0x18] sm:$0xff] %vm316, %v408
    %413 = vst.msk [vmem:[#allocation3] sm:$0xff] %vm316, %v337
    %414 = vst.msk [vmem:[#allocation3 + $0x8] sm:$0xff] %vm316, %v338
    %415 = vst.msk [vmem:[#allocation3 + $0x10] sm:$0xff] %vm316, %v339
    %416 = vst.msk [vmem:[#allocation3 + $0x18] sm:$0xff] %vm316, %v340
    // Predicated region
    $region30: #{transformer_forward.13} parent=1 // pred_check
      %p417 = pneg %p27
    $region31: #{transformer_forward.13} parent=1 // pred_check_branch
      %419 = sbr.rel (%p417) target = $region33
    $region32: #{transformer_forward.13} parent=1 // pred_region
      %v420 = vld [vmem:[#allocation3] sm:$0xff]
      %v421 = vld [vmem:[#allocation3 + $0x8] sm:$0xff]
      %v422 = vld [vmem:[#allocation3 + $0x10] sm:$0xff]
      %v423 = vld [vmem:[#allocation3 + $0x18] sm:$0xff]
      %v424 = vld [vmem:[#allocation4] sm:$0xff]
      %v425 = vld [vmem:[#allocation4 + $0x8] sm:$0xff]
      %v426 = vld [vmem:[#allocation4 + $0x10] sm:$0xff]
      %v427 = vld [vmem:[#allocation4 + $0x18] sm:$0xff]
      %v428 = vlog2.pop %v424
      %v429 = vmul.f32 %v428, 0.6931472
      %v430 = vlog2.pop %v425
      %v431 = vmul.f32 %v430, 0.6931472
      %v432 = vlog2.pop %v426
      %v433 = vmul.f32 %v432, 0.6931472
      %v434 = vlog2.pop %v427
      %v435 = vmul.f32 %v434, 0.6931472
      %v436 = vadd.f32 %v420, %v429
      %v437 = vadd.f32 %v421, %v431
      %v438 = vadd.f32 %v422, %v433
      %v439 = vadd.f32 %v423, %v435
      %vm440 = vcmp.ne.s32.totalorder %v266, 0
      %vm441 = vcmp.ne.s32.totalorder %v267, 0
      %vm442 = vcmp.ne.s32.totalorder %v268, 0
      %vm443 = vcmp.ne.s32.totalorder %v269, 0
      %v444 = vld [vmem:[#allocation5] sm:$0xff]
      %v445 = vld [vmem:[#allocation5 + $0x8] sm:$0xff]
      %v446 = vld [vmem:[#allocation5 + $0x10] sm:$0xff]
      %v447 = vld [vmem:[#allocation5 + $0x18] sm:$0xff]
      %v448 = vsub.f32 %v436, %v444
      %v449 = vsub.f32 %v437, %v445
      %v450 = vsub.f32 %v438, %v446
      %v451 = vsub.f32 %v439, %v447
      %v452 = vsel %vm440, %v448, 0.0
      %v453 = vsel %vm441, %v449, 0.0
      %v454 = vsel %vm442, %v450, 0.0
      %v455 = vsel %vm443, %v451, 0.0
      %456 = vst.msk [vmem:[%s6] sm:$0xff] %vm316, %v452
      %457 = vst.msk [vmem:[%s6 + $0x8] sm:$0xff] %vm316, %v453
      %458 = vst.msk [vmem:[%s6 + $0x10] sm:$0xff] %vm316, %v454
      %459 = vst.msk [vmem:[%s6 + $0x18] sm:$0xff] %vm316, %v455
    $region33: #{transformer_forward.13} parent=1 // pred_fallthru
      _
    // Predicated region
    $region34: #{transformer_forward.13} parent=1 // pred_check
      _
    $region35: #{transformer_forward.13} parent=1 // pred_check_branch
      %461 = sbr.rel (0) target = $region37
    $region36: #{transformer_forward.13} parent=1 // pred_region
      _
    $region37: #{transformer_forward.13} parent=1 // pred_fallthru
      _
    // Predicated region
    $region38: #{transformer_forward.13} parent=1 // pred_check
      _
    $region39: #{transformer_forward.13} parent=1 // pred_check_branch
      %463 = sbr.rel (0) target = $region41
    $region40: #{transformer_forward.13} parent=1 // pred_region
      %s465 = ssub.s32 512, 512
      %466 = vsyncadd [#allocation7], %s465
      %s467 = sshll.u32 [#allocation6], 4
      %s468 = int_to_ptr.vmem [resolvable:$true] %s467
      %473 = dma.vmem_to_hbm [thread:$0]  %s468, 512, %s7, [#allocation7], 128, 128, 8
    $region41: #{transformer_forward.13} parent=1 // pred_fallthru
      _
    // Predicated region
    $region42: #{transformer_forward.13} parent=1 // pred_check
      _
    $region43: #{transformer_forward.13} parent=1 // pred_check_branch
      %475 = sbr.rel (0) target = $region45
    $region44: #{transformer_forward.13} parent=1 // pred_region
      _
    $region45: #{transformer_forward.13} parent=1 // pred_fallthru
      _
    // Predicated region
    $region46: #{transformer_forward.13} parent=1 // pred_check
      _
    $region47: #{transformer_forward.13} parent=1 // pred_check_branch
      %477 = sbr.rel (0) target = $region49
    $region48: #{transformer_forward.13} parent=1 // pred_region
      %478 = dma.done [#allocation7], 512
    $region49: #{transformer_forward.13} parent=1 // pred_fallthru
      _
    %479 = vsyncpa [#allocation7], 1

</llo_original>
